<compile_context>
chip_gen: v7x
topology: tpu7x:2x2x1
jax: 0.10.0
libtpu: 0.0.40
codegen_flags: <defaults>
</compile_context>

<pallas_src>
import functools

import jax
import jax.numpy as jnp
from jax.experimental import pallas as pl
from jax.experimental.pallas import tpu as pltpu


def _pick_batch_tile(B):
    # v7x megacore: give each TensorCore half the batch when both halves stay
    # sublane-aligned; pure overhead otherwise (single-TC v5e/v6e is fine
    # either way since a 1-tile axis is a no-op).
    if B >= 16 and (B // 2) % 8 == 0:
        return B // 2
    return B


def _lstm_chunk_kernel(x_ref, aw_ref, hf_ref, w1_ref, w2_ref, w3_ref,
                       whh_ref, b_ref, h0_ref, c0_ref,
                       out_ref, hN_ref, cN_ref,
                       h_scr, c_scr, pre_scr, out_scr,
                       *, hidden, t_chunk, t_real, mm_dtype, lane_dense,
                       unroll):
    H = hidden
    Tc = t_chunk
    n = pl.program_id(1)
    Bt = h_scr.shape[0]

    # Load the initial state on the first chunk of this batch tile.
    @pl.when(n == 0)
    def _():
        h_scr[...] = h0_ref[...]
        c_scr[...] = c0_ref[...]

    # ---- Chunk-wide input projection (off the serial critical path). ----
    # No concatenated (B, T, D) tensor is ever materialized: one matmul per
    # input stream against the matching row-block of W_ih^T.
    def proj(ref, w_ref):
        a = ref[...].astype(mm_dtype).reshape(Bt * Tc, ref.shape[-1])
        return jnp.dot(a, w_ref[...], preferred_element_type=jnp.float32)

    pre = proj(x_ref, w1_ref) + proj(aw_ref, w2_ref) + proj(hf_ref, w3_ref)
    pre = pre + b_ref[...]                                   # fused bias, f32
    pre_scr[...] = pre.reshape(Bt, Tc, 4 * H)                # stage in VMEM
    # TODO(synk): double-buffer pre_scr and compute chunk n+1's projection
    # while chunk n's serial loop runs (overlap the MXU with the recurrence).

    whh = whh_ref[...]                                       # (H, 4H) resident
    # TODO(synk): pin W_hh in the MXU across the chunk via
    # pltpu.matmul_push_rhs / matmul_acc_lhs instead of re-feeding it per step.

    # sigmoid(x) = 0.5*tanh(x/2) + 0.5  ->  scale the i/f/o gate lanes by 0.5
    # and run ONE wide tanh over all 4H lanes (2 EUP launches/step, not 5).
    lane = jax.lax.broadcasted_iota(jnp.int32, (Bt, 4 * H), 1)
    is_g = (lane >= 2 * H) & (lane < 3 * H)
    act_scale = jnp.where(is_g, 1.0, 0.5).astype(jnp.float32)
    half = jnp.float32(0.5)
    chunk_start = n * Tc

    def step(t, carry):
        h, c = carry
        gx = pre_scr[:, pl.ds(t, 1), :].reshape(Bt, 4 * H)
        gates = gx + jnp.dot(h.astype(mm_dtype), whh,
                             preferred_element_type=jnp.float32)
        a = jnp.tanh(gates * act_scale)
        # PyTorch gate order [i, f, g, o].
        i_g = a[:, 0 * H:1 * H] * half + half
        f_g = a[:, 1 * H:2 * H] * half + half
        g_g = a[:, 2 * H:3 * H]
        o_g = a[:, 3 * H:4 * H] * half + half
        c_new = f_g * c + i_g * g_g
        h_new = o_g * jnp.tanh(c_new)
        if t_real is not None:              # padded tail: freeze the state
            valid = (chunk_start + t) < t_real
            h_new = jnp.where(valid, h_new, h)
            c_new = jnp.where(valid, c_new, c)
        out_scr[:, pl.ds(t, 1), :] = h_new.reshape(Bt, 1, H)
        return h_new, c_new

    h, c = jax.lax.fori_loop(0, Tc, step, (h_scr[...], c_scr[...]),
                             unroll=unroll)
    h_scr[...] = h
    c_scr[...] = c

    # One store of the whole chunk's hidden states; lane-dense when Tc*H is a
    # multiple of 128 (or the chunk covers the whole sequence).
    out_val = out_scr[...]
    if lane_dense:
        out_ref[...] = out_val.reshape(Bt, Tc * H).astype(out_ref.dtype)
    else:
        out_ref[...] = out_val.astype(out_ref.dtype)

    @pl.when(n == pl.num_programs(1) - 1)
    def _():
        hN_ref[...] = h.astype(hN_ref.dtype)
        cN_ref[...] = c.astype(cN_ref.dtype)


def lstm_output_layer(x, attention_weights, first_lstm_hidden_states,
                      lstm_state, params, *, matmul_dtype=jnp.bfloat16,
                      out_dtype=None, max_chunk=64):
    """Forward pass of LSTMOutputLayer.

    x: (B, T, 3); attention_weights: (B, T, vocab_len);
    first_lstm_hidden_states: (B, T, cell_size);
    lstm_state: (h0, c0), each (1, B, cell_size).
    params: dict with w_ih (4H, 3+vocab+cell), w_hh (4H, H), b_ih, b_hh (4H,).
    Returns (lstm_output (B, T, H), (h_n, c_n)).
    """
    h0, c0 = lstm_state
    B, T, Dx = x.shape
    V = attention_weights.shape[-1]
    C = first_lstm_hidden_states.shape[-1]
    H = h0.shape[-1]
    if out_dtype is None:
        out_dtype = x.dtype

    if T == 0:  # edge case: nothing to process
        return jnp.zeros((B, 0, H), out_dtype), (h0, c0)

    # Weights: split W_ih by input stream (column blocks of the PyTorch layout)
    # and pre-transpose. One-time transforms on small parameters only.
    w_ih = jnp.asarray(params["w_ih"])                          # (4H, Dx+V+C)
    w1 = w_ih[:, :Dx].T.astype(matmul_dtype)                    # (Dx, 4H)
    w2 = w_ih[:, Dx:Dx + V].T.astype(matmul_dtype)              # (V, 4H)
    w3 = w_ih[:, Dx + V:].T.astype(matmul_dtype)                # (C, 4H)
    whh = jnp.asarray(params["w_hh"]).T.astype(matmul_dtype)    # (H, 4H)
    bias = (jnp.asarray(params["b_ih"], jnp.float32)
            + jnp.asarray(params["b_hh"], jnp.float32)).reshape(1, 4 * H)
    h0_2d = h0[0].astype(jnp.float32)                           # (B, H)
    c0_2d = c0[0].astype(jnp.float32)                           # (B, H)

    # Time chunking: never fall back to a full static unroll; pad the tail and
    # freeze the state past T inside the kernel instead.
    if T <= max_chunk:
        t_chunk = T                      # block dim == full dim -> always legal
    else:
        t_chunk = max(16, (max_chunk // 16) * 16)   # bf16-friendly multiple of 16
    n_chunks = pl.cdiv(T, t_chunk)
    t_pad = n_chunks * t_chunk
    if t_pad != T:
        pad = ((0, 0), (0, t_pad - T), (0, 0))
        x = jnp.pad(x, pad)
        attention_weights = jnp.pad(attention_weights, pad)
        first_lstm_hidden_states = jnp.pad(first_lstm_hidden_states, pad)

    bt = _pick_batch_tile(B)
    n_btiles = B // bt
    lane_dense = (t_chunk * H) % 128 == 0 or n_chunks == 1
    unroll = True if t_chunk <= 16 else 8

    kernel = functools.partial(
        _lstm_chunk_kernel, hidden=H, t_chunk=t_chunk,
        t_real=(T if t_pad != T else None), mm_dtype=matmul_dtype,
        lane_dense=lane_dense, unroll=unroll)

    if lane_dense:
        out_struct = jax.ShapeDtypeStruct((B, t_pad * H), out_dtype)
        out_spec = pl.BlockSpec((bt, t_chunk * H), lambda b, n: (b, n))
    else:
        out_struct = jax.ShapeDtypeStruct((B, t_pad, H), out_dtype)
        out_spec = pl.BlockSpec((bt, t_chunk, H), lambda b, n: (b, n, 0))

    # TODO(synk): single-buffer the constant-index weight/bias/h0/c0 specs
    # (pipeline_mode=pl.Buffered(1)) when scaling vocab_len on v7x's 64 MiB VMEM.
    out, h_n, c_n = pl.pallas_call(
        kernel,
        out_shape=(
            out_struct,
            jax.ShapeDtypeStruct((B, H), jnp.float32),
            jax.ShapeDtypeStruct((B, H), jnp.float32),
        ),
        grid_spec=pltpu.PrefetchScalarGridSpec(
            num_scalar_prefetch=0,
            grid=(n_btiles, n_chunks),
            in_specs=[
                pl.BlockSpec((bt, t_chunk, Dx), lambda b, n: (b, n, 0)),  # x
                pl.BlockSpec((bt, t_chunk, V), lambda b, n: (b, n, 0)),   # attn w
                pl.BlockSpec((bt, t_chunk, C), lambda b, n: (b, n, 0)),   # h1 states
                pl.BlockSpec((Dx, 4 * H), lambda b, n: (0, 0)),           # W1
                pl.BlockSpec((V, 4 * H), lambda b, n: (0, 0)),            # W2
                pl.BlockSpec((C, 4 * H), lambda b, n: (0, 0)),            # W3
                pl.BlockSpec((H, 4 * H), lambda b, n: (0, 0)),            # W_hh^T
                pl.BlockSpec((1, 4 * H), lambda b, n: (0, 0)),            # fused bias
                pl.BlockSpec((bt, H), lambda b, n: (b, 0)),               # h0
                pl.BlockSpec((bt, H), lambda b, n: (b, 0)),               # c0
            ],
            out_specs=[
                out_spec,
                pl.BlockSpec((bt, H), lambda b, n: (b, 0)),               # h_n
                pl.BlockSpec((bt, H), lambda b, n: (b, 0)),               # c_n
            ],
            scratch_shapes=[
                pltpu.VMEM((bt, H), jnp.float32),                # h carry
                pltpu.VMEM((bt, H), jnp.float32),                # c carry
                pltpu.VMEM((bt, t_chunk, 4 * H), jnp.float32),   # staged pre
                pltpu.VMEM((bt, t_chunk, H), jnp.float32),       # staged outputs
            ],
        ),
        compiler_params=pltpu.CompilerParams(
            dimension_semantics=("parallel", "arbitrary"),
            vmem_limit_bytes=32 * 1024 * 1024),
    )(x, attention_weights, first_lstm_hidden_states,
      w1, w2, w3, whh, bias, h0_2d, c0_2d)

    if lane_dense:
        out = out.reshape(B, t_pad, H)       # free row-major reshape
    if t_pad != T:
        out = out[:, :T]
    return out, (h_n[None, ...].astype(h0.dtype),
                 c_n[None, ...].astype(c0.dtype))


def _reference_lstm(lstm_input, h0, c0, params):
    """Pure-JAX f32 reference (lax.scan) mirroring nn.LSTM semantics."""
    wih = params["w_ih"].astype(jnp.float32)
    whh = params["w_hh"].astype(jnp.float32)
    b = (params["b_ih"] + params["b_hh"]).astype(jnp.float32)
    H = h0.shape[-1]
    hi = jax.lax.Precision.HIGHEST

    def step(carry, x_t):
        h, c = carry
        gates = (jnp.dot(x_t, wih.T, precision=hi)
                 + jnp.dot(h, whh.T, precision=hi) + b)
        i = jax.nn.sigmoid(gates[:, 0 * H:1 * H])
        f = jax.nn.sigmoid(gates[:, 1 * H:2 * H])
        g = jnp.tanh(gates[:, 2 * H:3 * H])
        o = jax.nn.sigmoid(gates[:, 3 * H:4 * H])
        c_new = f * c + i * g
        h_new = o * jnp.tanh(c_new)
        return (h_new, c_new), h_new

    x_tm = jnp.transpose(lstm_input, (1, 0, 2)).astype(jnp.float32)
    (h_n, c_n), ys = jax.lax.scan(
        step, (h0[0].astype(jnp.float32), c0[0].astype(jnp.float32)), x_tm)
    return jnp.transpose(ys, (1, 0, 2)), (h_n[None], c_n[None])


if __name__ == "__main__":
    B, T = 2, 8
    vocab_len, cell_size = 13, 32
    H = cell_size

    key = jax.random.PRNGKey(0)
    ks = jax.random.split(key, 12)
    s = H ** -0.5   # PyTorch-style uniform init scale

    params = {
        "w_ih": jax.random.uniform(ks[0], (4 * H, 3 + vocab_len + cell_size),
                                   jnp.float32, -s, s),
        "w_hh": jax.random.uniform(ks[1], (4 * H, H), jnp.float32, -s, s),
        "b_ih": jax.random.uniform(ks[2], (4 * H,), jnp.float32, -s, s),
        "b_hh": jax.random.uniform(ks[3], (4 * H,), jnp.float32, -s, s),
    }
    x = jax.random.normal(ks[4], (B, T, 3), jnp.float32)
    aw = jax.random.normal(ks[5], (B, T, vocab_len), jnp.float32)
    hf = jax.random.normal(ks[6], (B, T, cell_size), jnp.float32)
    h0 = jax.random.normal(ks[7], (1, B, cell_size), jnp.float32)
    c0 = jax.random.normal(ks[8], (1, B, cell_size), jnp.float32)

    ref_out, (ref_h, ref_c) = _reference_lstm(
        jnp.concatenate([x, aw, hf], -1), h0, c0, params)

    # Full f32 recurrent path (tight accuracy, v5e-friendly).
    out, (h_n, c_n) = lstm_output_layer(x, aw, hf, (h0, c0), params,
                                        matmul_dtype=jnp.float32)
    jax.block_until_ready((out, h_n, c_n))
    assert out.shape == (B, T, H) and h_n.shape == (1, B, H)
    assert jnp.allclose(out, ref_out, atol=1e-2, rtol=1e-2)
    assert jnp.allclose(h_n, ref_h, atol=1e-2, rtol=1e-2)
    assert jnp.allclose(c_n, ref_c, atol=1e-2, rtol=1e-2)

    # bf16 matmul operands, f32 state/elementwise (fast path).
    out_bf, (h_bf, c_bf) = lstm_output_layer(x, aw, hf, (h0, c0), params,
                                             matmul_dtype=jnp.bfloat16)
    jax.block_until_ready((out_bf, h_bf, c_bf))
    assert jnp.allclose(out_bf, ref_out, atol=5e-2, rtol=5e-2)
    assert jnp.allclose(h_bf, ref_h, atol=5e-2, rtol=5e-2)
    assert jnp.allclose(c_bf, ref_c, atol=5e-2, rtol=5e-2)

    # Multi-chunk + padded-tail path: T=40, 16-step chunks -> T_pad=48, masked.
    T2 = 40
    x2 = jax.random.normal(ks[9], (B, T2, 3), jnp.float32)
    aw2 = jax.random.normal(ks[10], (B, T2, vocab_len), jnp.float32)
    hf2 = jax.random.normal(ks[11], (B, T2, cell_size), jnp.float32)
    ref2, (rh2, rc2) = _reference_lstm(jnp.concatenate([x2, aw2, hf2], -1),
                                       h0, c0, params)
    out2, (h2, c2) = lstm_output_layer(x2, aw2, hf2, (h0, c0), params,
                                       matmul_dtype=jnp.float32, max_chunk=16)
    jax.block_until_ready((out2, h2, c2))
    assert out2.shape == (B, T2, H)
    assert jnp.allclose(out2, ref2, atol=1e-2, rtol=1e-2)
    assert jnp.allclose(h2, rh2, atol=1e-2, rtol=1e-2)
    assert jnp.allclose(c2, rc2, atol=1e-2, rtol=1e-2)

    print("KERNEL_OK")
</pallas_src>

<mosaic_0001>
module attributes {stable_mosaic.version = 11 : i64} {
  func.func @_lstm_chunk_kernel(%arg0: i32, %arg1: i32, %arg2: memref<2x8x3xf32, #tpu.memory_space<vmem>>, %arg3: memref<2x8x13xf32, #tpu.memory_space<vmem>>, %arg4: memref<2x8x32xf32, #tpu.memory_space<vmem>>, %arg5: memref<3x128xf32, #tpu.memory_space<vmem>>, %arg6: memref<13x128xf32, #tpu.memory_space<vmem>>, %arg7: memref<32x128xf32, #tpu.memory_space<vmem>>, %arg8: memref<32x128xf32, #tpu.memory_space<vmem>>, %arg9: memref<1x128xf32, #tpu.memory_space<vmem>>, %arg10: memref<2x32xf32, #tpu.memory_space<vmem>>, %arg11: memref<2x32xf32, #tpu.memory_space<vmem>>, %arg12: memref<2x256xf32, #tpu.memory_space<vmem>>, %arg13: memref<2x32xf32, #tpu.memory_space<vmem>>, %arg14: memref<2x32xf32, #tpu.memory_space<vmem>>, %arg15: memref<2x32xf32, #tpu.memory_space<vmem>>, %arg16: memref<2x32xf32, #tpu.memory_space<vmem>>, %arg17: memref<2x8x128xf32, #tpu.memory_space<vmem>>, %arg18: memref<2x8x32xf32, #tpu.memory_space<vmem>>) attributes {dimension_semantics = [#tpu.dimension_semantics<parallel>, #tpu.dimension_semantics<arbitrary>], iteration_bounds = array<i64: 1, 1>, scalar_prefetch = 0 : i64, scratch_operands = 4 : i64, tpu.core_type = #tpu.core_type<tc>, window_params = [{transform_indices = @transform_0, window_bounds = array<i64: 2, 8, 3>}, {transform_indices = @transform_1, window_bounds = array<i64: 2, 8, 13>}, {transform_indices = @transform_2, window_bounds = array<i64: 2, 8, 32>}, {pipeline_mode = #tpu.pipeline_mode<synchronous>, transform_indices = @transform_3, window_bounds = array<i64: 3, 128>}, {pipeline_mode = #tpu.pipeline_mode<synchronous>, transform_indices = @transform_4, window_bounds = array<i64: 13, 128>}, {pipeline_mode = #tpu.pipeline_mode<synchronous>, transform_indices = @transform_5, window_bounds = array<i64: 32, 128>}, {pipeline_mode = #tpu.pipeline_mode<synchronous>, transform_indices = @transform_6, window_bounds = array<i64: 32, 128>}, {pipeline_mode = #tpu.pipeline_mode<synchronous>, transform_indices = @transform_7, window_bounds = array<i64: 1, 128>}, {transform_indices = @transform_8, window_bounds = array<i64: 2, 32>}, {transform_indices = @transform_9, window_bounds = array<i64: 2, 32>}, {transform_indices = @transform_10, window_bounds = array<i64: 2, 256>}, {transform_indices = @transform_11, window_bounds = array<i64: 2, 32>}, {transform_indices = @transform_12, window_bounds = array<i64: 2, 32>}]} {
    %c0_i32 = arith.constant 0 : i32
    %0 = arith.cmpi eq, %arg1, %c0_i32 : i32
    %1 = arith.extui %0 : i1 to i32
    %c0_i32_0 = arith.constant 0 : i32
    %2 = arith.cmpi ne, %1, %c0_i32_0 : i32
    scf.if %2 {
      %c0_83 = arith.constant 0 : index
      %c0_84 = arith.constant 0 : index
      %290 = vector.load %arg10[%c0_83, %c0_84] : memref<2x32xf32, #tpu.memory_space<vmem>>, vector<2x32xf32>
      %c0_85 = arith.constant 0 : index
      %c0_86 = arith.constant 0 : index
      %291 = vector.load %arg15[%c0_85, %c0_86] : memref<2x32xf32, #tpu.memory_space<vmem>>, vector<2x32xf32>
      tpu.vector_store %arg15[%c0_85, %c0_86], %290 {strides = array<i32>} : memref<2x32xf32, #tpu.memory_space<vmem>>, vector<2x32xf32>,
      %c0_87 = arith.constant 0 : index
      %c0_88 = arith.constant 0 : index
      %292 = vector.load %arg11[%c0_87, %c0_88] : memref<2x32xf32, #tpu.memory_space<vmem>>, vector<2x32xf32>
      %c0_89 = arith.constant 0 : index
      %c0_90 = arith.constant 0 : index
      %293 = vector.load %arg16[%c0_89, %c0_90] : memref<2x32xf32, #tpu.memory_space<vmem>>, vector<2x32xf32>
      tpu.vector_store %arg16[%c0_89, %c0_90], %292 {strides = array<i32>} : memref<2x32xf32, #tpu.memory_space<vmem>>, vector<2x32xf32>,
    } else {
    }
    %c0 = arith.constant 0 : index
    %c0_1 = arith.constant 0 : index
    %c0_2 = arith.constant 0 : index
    %3 = vector.load %arg2[%c0, %c0_1, %c0_2] : memref<2x8x3xf32, #tpu.memory_space<vmem>>, vector<2x8x3xf32>
    %4 = vector.shape_cast %3 : vector<2x8x3xf32> to vector<16x3xf32>
    %c0_3 = arith.constant 0 : index
    %c0_4 = arith.constant 0 : index
    %5 = vector.load %arg5[%c0_3, %c0_4] : memref<3x128xf32, #tpu.memory_space<vmem>>, vector<3x128xf32>
    %cst = arith.constant dense<0.000000e+00> : vector<16x128xf32>
    %6 = tpu.matmul %4, %5, %cst {dimension_numbers = #tpu.dot_dimension_numbers<[1], [0], [0], [1], [0, 0, 1, 1], [], []>} : vector<16x3xf32>, vector<3x128xf32>, vector<16x128xf32> -> vector<16x128xf32>
    %c0_5 = arith.constant 0 : index
    %c0_6 = arith.constant 0 : index
    %c0_7 = arith.constant 0 : index
    %7 = vector.load %arg3[%c0_5, %c0_6, %c0_7] : memref<2x8x13xf32, #tpu.memory_space<vmem>>, vector<2x8x13xf32>
    %8 = vector.shape_cast %7 : vector<2x8x13xf32> to vector<16x13xf32>
    %c0_8 = arith.constant 0 : index
    %c0_9 = arith.constant 0 : index
    %9 = vector.load %arg6[%c0_8, %c0_9] : memref<13x128xf32, #tpu.memory_space<vmem>>, vector<13x128xf32>
    %cst_10 = arith.constant dense<0.000000e+00> : vector<16x128xf32>
    %10 = tpu.matmul %8, %9, %cst_10 {dimension_numbers = #tpu.dot_dimension_numbers<[1], [0], [0], [1], [0, 0, 1, 1], [], []>} : vector<16x13xf32>, vector<13x128xf32>, vector<16x128xf32> -> vector<16x128xf32>
    %11 = arith.addf %6, %10 : vector<16x128xf32>
    %c0_11 = arith.constant 0 : index
    %c0_12 = arith.constant 0 : index
    %c0_13 = arith.constant 0 : index
    %12 = vector.load %arg4[%c0_11, %c0_12, %c0_13] : memref<2x8x32xf32, #tpu.memory_space<vmem>>, vector<2x8x32xf32>
    %13 = vector.shape_cast %12 : vector<2x8x32xf32> to vector<16x32xf32>
    %c0_14 = arith.constant 0 : index
    %c0_15 = arith.constant 0 : index
    %14 = vector.load %arg7[%c0_14, %c0_15] : memref<32x128xf32, #tpu.memory_space<vmem>>, vector<32x128xf32>
    %cst_16 = arith.constant dense<0.000000e+00> : vector<16x128xf32>
    %15 = tpu.matmul %13, %14, %cst_16 {dimension_numbers = #tpu.dot_dimension_numbers<[1], [0], [0], [1], [0, 0, 1, 1], [], []>} : vector<16x32xf32>, vector<32x128xf32>, vector<16x128xf32> -> vector<16x128xf32>
    %16 = arith.addf %11, %15 : vector<16x128xf32>
    %c0_17 = arith.constant 0 : index
    %c0_18 = arith.constant 0 : index
    %17 = vector.load %arg9[%c0_17, %c0_18] : memref<1x128xf32, #tpu.memory_space<vmem>>, vector<1x128xf32>
    %18 = vector.broadcast %17 : vector<1x128xf32> to vector<16x128xf32>
    %19 = arith.addf %16, %18 : vector<16x128xf32>
    %20 = vector.shape_cast %19 : vector<16x128xf32> to vector<2x8x128xf32>
    %c0_19 = arith.constant 0 : index
    %c0_20 = arith.constant 0 : index
    %c0_21 = arith.constant 0 : index
    %21 = vector.load %arg17[%c0_19, %c0_20, %c0_21] : memref<2x8x128xf32, #tpu.memory_space<vmem>>, vector<2x8x128xf32>
    tpu.vector_store %arg17[%c0_19, %c0_20, %c0_21], %20 {strides = array<i32>} : memref<2x8x128xf32, #tpu.memory_space<vmem>>, vector<2x8x128xf32>,
    %c0_22 = arith.constant 0 : index
    %c0_23 = arith.constant 0 : index
    %22 = vector.load %arg8[%c0_22, %c0_23] : memref<32x128xf32, #tpu.memory_space<vmem>>, vector<32x128xf32>
    %23 = tpu.iota {dimensions = array<i32: 1>} : vector<2x128xi32>
    %c64_i32 = arith.constant 64 : i32
    %24 = vector.broadcast %c64_i32 : i32 to vector<2x128xi32>
    %25 = arith.cmpi sge, %23, %24 : vector<2x128xi32>
    %c96_i32 = arith.constant 96 : i32
    %26 = vector.broadcast %c96_i32 : i32 to vector<2x128xi32>
    %27 = arith.cmpi slt, %23, %26 : vector<2x128xi32>
    %28 = arith.andi %25, %27 : vector<2x128xi1>
    %cst_24 = arith.constant 1.000000e+00 : f32
    %cst_25 = arith.constant 5.000000e-01 : f32
    %29 = vector.broadcast %cst_24 : f32 to vector<2x128xf32>
    %30 = vector.broadcast %cst_25 : f32 to vector<2x128xf32>
    %31 = arith.select %28, %29, %30 : vector<2x128xi1>, vector<2x128xf32>
    %c0_26 = arith.constant 0 : index
    %c0_27 = arith.constant 0 : index
    %32 = vector.load %arg15[%c0_26, %c0_27] : memref<2x32xf32, #tpu.memory_space<vmem>>, vector<2x32xf32>
    %c0_28 = arith.constant 0 : index
    %c0_29 = arith.constant 0 : index
    %33 = vector.load %arg16[%c0_28, %c0_29] : memref<2x32xf32, #tpu.memory_space<vmem>>, vector<2x32xf32>
    %cst_30 = arith.constant 5.000000e-01 : f32
    %c0_i32_31 = arith.constant 0 : i32
    %c0_32 = arith.constant 0 : index
    %34 = arith.index_cast %c0_i32_31 : i32 to index
    %c0_33 = arith.constant 0 : index
    %35 = vector.load %arg17[%c0_32, %34, %c0_33] : memref<2x8x128xf32, #tpu.memory_space<vmem>>, vector<2x1x128xf32>
    %36 = vector.shape_cast %35 : vector<2x1x128xf32> to vector<2x128xf32>
    %cst_34 = arith.constant dense<0.000000e+00> : vector<2x128xf32>
    %37 = tpu.matmul %32, %22, %cst_34 {dimension_numbers = #tpu.dot_dimension_numbers<[1], [0], [0], [1], [0, 0, 1, 1], [], []>} : vector<2x32xf32>, vector<32x128xf32>, vector<2x128xf32> -> vector<2x128xf32>
    %38 = arith.addf %36, %37 : vector<2x128xf32>
    %39 = arith.mulf %38, %31 : vector<2x128xf32>
    %40 = math.tanh %39 : vector<2x128xf32>
    %41 = vector.extract_strided_slice %40 {offsets = [0, 0], sizes = [2, 32], strides = [1, 1]} : vector<2x128xf32> to vector<2x32xf32>
    %42 = vector.broadcast %cst_30 : f32 to vector<2x32xf32>
    %43 = arith.mulf %41, %42 : vector<2x32xf32>
    %44 = vector.broadcast %cst_30 : f32 to vector<2x32xf32>
    %45 = arith.addf %43, %44 : vector<2x32xf32>
    %46 = vector.extract_strided_slice %40 {offsets = [0, 32], sizes = [2, 32], strides = [1, 1]} : vector<2x128xf32> to vector<2x32xf32>
    %47 = vector.broadcast %cst_30 : f32 to vector<2x32xf32>
    %48 = arith.mulf %46, %47 : vector<2x32xf32>
    %49 = vector.broadcast %cst_30 : f32 to vector<2x32xf32>
    %50 = arith.addf %48, %49 : vector<2x32xf32>
    %51 = vector.extract_strided_slice %40 {offsets = [0, 64], sizes = [2, 32], strides = [1, 1]} : vector<2x128xf32> to vector<2x32xf32>
    %52 = vector.extract_strided_slice %40 {offsets = [0, 96], sizes = [2, 32], strides = [1, 1]} : vector<2x128xf32> to vector<2x32xf32>
    %53 = vector.broadcast %cst_30 : f32 to vector<2x32xf32>
    %54 = arith.mulf %52, %53 : vector<2x32xf32>
    %55 = vector.broadcast %cst_30 : f32 to vector<2x32xf32>
    %56 = arith.addf %54, %55 : vector<2x32xf32>
    %57 = arith.mulf %50, %33 : vector<2x32xf32>
    %58 = arith.mulf %45, %51 : vector<2x32xf32>
    %59 = arith.addf %57, %58 : vector<2x32xf32>
    %60 = math.tanh %59 : vector<2x32xf32>
    %61 = arith.mulf %56, %60 : vector<2x32xf32>
    %62 = vector.shape_cast %61 : vector<2x32xf32> to vector<2x1x32xf32>
    %c0_35 = arith.constant 0 : index
    %63 = arith.index_cast %c0_i32_31 : i32 to index
    %c0_36 = arith.constant 0 : index
    %64 = vector.load %arg18[%c0_35, %63, %c0_36] : memref<2x8x32xf32, #tpu.memory_space<vmem>>, vector<2x1x32xf32>
    tpu.vector_store %arg18[%c0_35, %63, %c0_36], %62 {strides = array<i32>} : memref<2x8x32xf32, #tpu.memory_space<vmem>>, vector<2x1x32xf32>,
    %c1_i32 = arith.constant 1 : i32
    %c0_37 = arith.constant 0 : index
    %65 = arith.index_cast %c1_i32 : i32 to index
    %c0_38 = arith.constant 0 : index
    %66 = vector.load %arg17[%c0_37, %65, %c0_38] : memref<2x8x128xf32, #tpu.memory_space<vmem>>, vector<2x1x128xf32>
    %67 = vector.shape_cast %66 : vector<2x1x128xf32> to vector<2x128xf32>
    %cst_39 = arith.constant dense<0.000000e+00> : vector<2x128xf32>
    %68 = tpu.matmul %61, %22, %cst_39 {dimension_numbers = #tpu.dot_dimension_numbers<[1], [0], [0], [1], [0, 0, 1, 1], [], []>} : vector<2x32xf32>, vector<32x128xf32>, vector<2x128xf32> -> vector<2x128xf32>
    %69 = arith.addf %67, %68 : vector<2x128xf32>
    %70 = arith.mulf %69, %31 : vector<2x128xf32>
    %71 = math.tanh %70 : vector<2x128xf32>
    %72 = vector.extract_strided_slice %71 {offsets = [0, 0], sizes = [2, 32], strides = [1, 1]} : vector<2x128xf32> to vector<2x32xf32>
    %73 = vector.broadcast %cst_30 : f32 to vector<2x32xf32>
    %74 = arith.mulf %72, %73 : vector<2x32xf32>
    %75 = vector.broadcast %cst_30 : f32 to vector<2x32xf32>
    %76 = arith.addf %74, %75 : vector<2x32xf32>
    %77 = vector.extract_strided_slice %71 {offsets = [0, 32], sizes = [2, 32], strides = [1, 1]} : vector<2x128xf32> to vector<2x32xf32>
    %78 = vector.broadcast %cst_30 : f32 to vector<2x32xf32>
    %79 = arith.mulf %77, %78 : vector<2x32xf32>
    %80 = vector.broadcast %cst_30 : f32 to vector<2x32xf32>
    %81 = arith.addf %79, %80 : vector<2x32xf32>
    %82 = vector.extract_strided_slice %71 {offsets = [0, 64], sizes = [2, 32], strides = [1, 1]} : vector<2x128xf32> to vector<2x32xf32>
    %83 = vector.extract_strided_slice %71 {offsets = [0, 96], sizes = [2, 32], strides = [1, 1]} : vector<2x128xf32> to vector<2x32xf32>
    %84 = vector.broadcast %cst_30 : f32 to vector<2x32xf32>
    %85 = arith.mulf %83, %84 : vector<2x32xf32>
    %86 = vector.broadcast %cst_30 : f32 to vector<2x32xf32>
    %87 = arith.addf %85, %86 : vector<2x32xf32>
    %88 = arith.mulf %81, %59 : vector<2x32xf32>
    %89 = arith.mulf %76, %82 : vector<2x32xf32>
    %90 = arith.addf %88, %89 : vector<2x32xf32>
    %91 = math.tanh %90 : vector<2x32xf32>
    %92 = arith.mulf %87, %91 : vector<2x32xf32>
    %93 = vector.shape_cast %92 : vector<2x32xf32> to vector<2x1x32xf32>
    %c0_40 = arith.constant 0 : index
    %94 = arith.index_cast %c1_i32 : i32 to index
    %c0_41 = arith.constant 0 : index
    %95 = vector.load %arg18[%c0_40, %94, %c0_41] : memref<2x8x32xf32, #tpu.memory_space<vmem>>, vector<2x1x32xf32>
    tpu.vector_store %arg18[%c0_40, %94, %c0_41], %93 {strides = array<i32>} : memref<2x8x32xf32, #tpu.memory_space<vmem>>, vector<2x1x32xf32>,
    %c2_i32 = arith.constant 2 : i32
    %c0_42 = arith.constant 0 : index
    %96 = arith.index_cast %c2_i32 : i32 to index
    %c0_43 = arith.constant 0 : index
    %97 = vector.load %arg17[%c0_42, %96, %c0_43] : memref<2x8x128xf32, #tpu.memory_space<vmem>>, vector<2x1x128xf32>
    %98 = vector.shape_cast %97 : vector<2x1x128xf32> to vector<2x128xf32>
    %cst_44 = arith.constant dense<0.000000e+00> : vector<2x128xf32>
    %99 = tpu.matmul %92, %22, %cst_44 {dimension_numbers = #tpu.dot_dimension_numbers<[1], [0], [0], [1], [0, 0, 1, 1], [], []>} : vector<2x32xf32>, vector<32x128xf32>, vector<2x128xf32> -> vector<2x128xf32>
    %100 = arith.addf %98, %99 : vector<2x128xf32>
    %101 = arith.mulf %100, %31 : vector<2x128xf32>
    %102 = math.tanh %101 : vector<2x128xf32>
    %103 = vector.extract_strided_slice %102 {offsets = [0, 0], sizes = [2, 32], strides = [1, 1]} : vector<2x128xf32> to vector<2x32xf32>
    %104 = vector.broadcast %cst_30 : f32 to vector<2x32xf32>
    %105 = arith.mulf %103, %104 : vector<2x32xf32>
    %106 = vector.broadcast %cst_30 : f32 to vector<2x32xf32>
    %107 = arith.addf %105, %106 : vector<2x32xf32>
    %108 = vector.extract_strided_slice %102 {offsets = [0, 32], sizes = [2, 32], strides = [1, 1]} : vector<2x128xf32> to vector<2x32xf32>
    %109 = vector.broadcast %cst_30 : f32 to vector<2x32xf32>
    %110 = arith.mulf %108, %109 : vector<2x32xf32>
    %111 = vector.broadcast %cst_30 : f32 to vector<2x32xf32>
    %112 = arith.addf %110, %111 : vector<2x32xf32>
    %113 = vector.extract_strided_slice %102 {offsets = [0, 64], sizes = [2, 32], strides = [1, 1]} : vector<2x128xf32> to vector<2x32xf32>
    %114 = vector.extract_strided_slice %102 {offsets = [0, 96], sizes = [2, 32], strides = [1, 1]} : vector<2x128xf32> to vector<2x32xf32>
    %115 = vector.broadcast %cst_30 : f32 to vector<2x32xf32>
    %116 = arith.mulf %114, %115 : vector<2x32xf32>
    %117 = vector.broadcast %cst_30 : f32 to vector<2x32xf32>
    %118 = arith.addf %116, %117 : vector<2x32xf32>
    %119 = arith.mulf %112, %90 : vector<2x32xf32>
    %120 = arith.mulf %107, %113 : vector<2x32xf32>
    %121 = arith.addf %119, %120 : vector<2x32xf32>
    %122 = math.tanh %121 : vector<2x32xf32>
    %123 = arith.mulf %118, %122 : vector<2x32xf32>
    %124 = vector.shape_cast %123 : vector<2x32xf32> to vector<2x1x32xf32>
    %c0_45 = arith.constant 0 : index
    %125 = arith.index_cast %c2_i32 : i32 to index
    %c0_46 = arith.constant 0 : index
    %126 = vector.load %arg18[%c0_45, %125, %c0_46] : memref<2x8x32xf32, #tpu.memory_space<vmem>>, vector<2x1x32xf32>
    tpu.vector_store %arg18[%c0_45, %125, %c0_46], %124 {strides = array<i32>} : memref<2x8x32xf32, #tpu.memory_space<vmem>>, vector<2x1x32xf32>,
    %c3_i32 = arith.constant 3 : i32
    %c0_47 = arith.constant 0 : index
    %127 = arith.index_cast %c3_i32 : i32 to index
    %c0_48 = arith.constant 0 : index
    %128 = vector.load %arg17[%c0_47, %127, %c0_48] : memref<2x8x128xf32, #tpu.memory_space<vmem>>, vector<2x1x128xf32>
    %129 = vector.shape_cast %128 : vector<2x1x128xf32> to vector<2x128xf32>
    %cst_49 = arith.constant dense<0.000000e+00> : vector<2x128xf32>
    %130 = tpu.matmul %123, %22, %cst_49 {dimension_numbers = #tpu.dot_dimension_numbers<[1], [0], [0], [1], [0, 0, 1, 1], [], []>} : vector<2x32xf32>, vector<32x128xf32>, vector<2x128xf32> -> vector<2x128xf32>
    %131 = arith.addf %129, %130 : vector<2x128xf32>
    %132 = arith.mulf %131, %31 : vector<2x128xf32>
    %133 = math.tanh %132 : vector<2x128xf32>
    %134 = vector.extract_strided_slice %133 {offsets = [0, 0], sizes = [2, 32], strides = [1, 1]} : vector<2x128xf32> to vector<2x32xf32>
    %135 = vector.broadcast %cst_30 : f32 to vector<2x32xf32>
    %136 = arith.mulf %134, %135 : vector<2x32xf32>
    %137 = vector.broadcast %cst_30 : f32 to vector<2x32xf32>
    %138 = arith.addf %136, %137 : vector<2x32xf32>
    %139 = vector.extract_strided_slice %133 {offsets = [0, 32], sizes = [2, 32], strides = [1, 1]} : vector<2x128xf32> to vector<2x32xf32>
    %140 = vector.broadcast %cst_30 : f32 to vector<2x32xf32>
    %141 = arith.mulf %139, %140 : vector<2x32xf32>
    %142 = vector.broadcast %cst_30 : f32 to vector<2x32xf32>
    %143 = arith.addf %141, %142 : vector<2x32xf32>
    %144 = vector.extract_strided_slice %133 {offsets = [0, 64], sizes = [2, 32], strides = [1, 1]} : vector<2x128xf32> to vector<2x32xf32>
    %145 = vector.extract_strided_slice %133 {offsets = [0, 96], sizes = [2, 32], strides = [1, 1]} : vector<2x128xf32> to vector<2x32xf32>
    %146 = vector.broadcast %cst_30 : f32 to vector<2x32xf32>
    %147 = arith.mulf %145, %146 : vector<2x32xf32>
    %148 = vector.broadcast %cst_30 : f32 to vector<2x32xf32>
    %149 = arith.addf %147, %148 : vector<2x32xf32>
    %150 = arith.mulf %143, %121 : vector<2x32xf32>
    %151 = arith.mulf %138, %144 : vector<2x32xf32>
    %152 = arith.addf %150, %151 : vector<2x32xf32>
    %153 = math.tanh %152 : vector<2x32xf32>
    %154 = arith.mulf %149, %153 : vector<2x32xf32>
    %155 = vector.shape_cast %154 : vector<2x32xf32> to vector<2x1x32xf32>
    %c0_50 = arith.constant 0 : index
    %156 = arith.index_cast %c3_i32 : i32 to index
    %c0_51 = arith.constant 0 : index
    %157 = vector.load %arg18[%c0_50, %156, %c0_51] : memref<2x8x32xf32, #tpu.memory_space<vmem>>, vector<2x1x32xf32>
    tpu.vector_store %arg18[%c0_50, %156, %c0_51], %155 {strides = array<i32>} : memref<2x8x32xf32, #tpu.memory_space<vmem>>, vector<2x1x32xf32>,
    %c4_i32 = arith.constant 4 : i32
    %c0_52 = arith.constant 0 : index
    %158 = arith.index_cast %c4_i32 : i32 to index
    %c0_53 = arith.constant 0 : index
    %159 = vector.load %arg17[%c0_52, %158, %c0_53] : memref<2x8x128xf32, #tpu.memory_space<vmem>>, vector<2x1x128xf32>
    %160 = vector.shape_cast %159 : vector<2x1x128xf32> to vector<2x128xf32>
    %cst_54 = arith.constant dense<0.000000e+00> : vector<2x128xf32>
    %161 = tpu.matmul %154, %22, %cst_54 {dimension_numbers = #tpu.dot_dimension_numbers<[1], [0], [0], [1], [0, 0, 1, 1], [], []>} : vector<2x32xf32>, vector<32x128xf32>, vector<2x128xf32> -> vector<2x128xf32>
    %162 = arith.addf %160, %161 : vector<2x128xf32>
    %163 = arith.mulf %162, %31 : vector<2x128xf32>
    %164 = math.tanh %163 : vector<2x128xf32>
    %165 = vector.extract_strided_slice %164 {offsets = [0, 0], sizes = [2, 32], strides = [1, 1]} : vector<2x128xf32> to vector<2x32xf32>
    %166 = vector.broadcast %cst_30 : f32 to vector<2x32xf32>
    %167 = arith.mulf %165, %166 : vector<2x32xf32>
    %168 = vector.broadcast %cst_30 : f32 to vector<2x32xf32>
    %169 = arith.addf %167, %168 : vector<2x32xf32>
    %170 = vector.extract_strided_slice %164 {offsets = [0, 32], sizes = [2, 32], strides = [1, 1]} : vector<2x128xf32> to vector<2x32xf32>
    %171 = vector.broadcast %cst_30 : f32 to vector<2x32xf32>
    %172 = arith.mulf %170, %171 : vector<2x32xf32>
    %173 = vector.broadcast %cst_30 : f32 to vector<2x32xf32>
    %174 = arith.addf %172, %173 : vector<2x32xf32>
    %175 = vector.extract_strided_slice %164 {offsets = [0, 64], sizes = [2, 32], strides = [1, 1]} : vector<2x128xf32> to vector<2x32xf32>
    %176 = vector.extract_strided_slice %164 {offsets = [0, 96], sizes = [2, 32], strides = [1, 1]} : vector<2x128xf32> to vector<2x32xf32>
    %177 = vector.broadcast %cst_30 : f32 to vector<2x32xf32>
    %178 = arith.mulf %176, %177 : vector<2x32xf32>
    %179 = vector.broadcast %cst_30 : f32 to vector<2x32xf32>
    %180 = arith.addf %178, %179 : vector<2x32xf32>
    %181 = arith.mulf %174, %152 : vector<2x32xf32>
    %182 = arith.mulf %169, %175 : vector<2x32xf32>
    %183 = arith.addf %181, %182 : vector<2x32xf32>
    %184 = math.tanh %183 : vector<2x32xf32>
    %185 = arith.mulf %180, %184 : vector<2x32xf32>
    %186 = vector.shape_cast %185 : vector<2x32xf32> to vector<2x1x32xf32>
    %c0_55 = arith.constant 0 : index
    %187 = arith.index_cast %c4_i32 : i32 to index
    %c0_56 = arith.constant 0 : index
    %188 = vector.load %arg18[%c0_55, %187, %c0_56] : memref<2x8x32xf32, #tpu.memory_space<vmem>>, vector<2x1x32xf32>
    tpu.vector_store %arg18[%c0_55, %187, %c0_56], %186 {strides = array<i32>} : memref<2x8x32xf32, #tpu.memory_space<vmem>>, vector<2x1x32xf32>,
    %c5_i32 = arith.constant 5 : i32
    %c0_57 = arith.constant 0 : index
    %189 = arith.index_cast %c5_i32 : i32 to index
    %c0_58 = arith.constant 0 : index
    %190 = vector.load %arg17[%c0_57, %189, %c0_58] : memref<2x8x128xf32, #tpu.memory_space<vmem>>, vector<2x1x128xf32>
    %191 = vector.shape_cast %190 : vector<2x1x128xf32> to vector<2x128xf32>
    %cst_59 = arith.constant dense<0.000000e+00> : vector<2x128xf32>
    %192 = tpu.matmul %185, %22, %cst_59 {dimension_numbers = #tpu.dot_dimension_numbers<[1], [0], [0], [1], [0, 0, 1, 1], [], []>} : vector<2x32xf32>, vector<32x128xf32>, vector<2x128xf32> -> vector<2x128xf32>
    %193 = arith.addf %191, %192 : vector<2x128xf32>
    %194 = arith.mulf %193, %31 : vector<2x128xf32>
    %195 = math.tanh %194 : vector<2x128xf32>
    %196 = vector.extract_strided_slice %195 {offsets = [0, 0], sizes = [2, 32], strides = [1, 1]} : vector<2x128xf32> to vector<2x32xf32>
    %197 = vector.broadcast %cst_30 : f32 to vector<2x32xf32>
    %198 = arith.mulf %196, %197 : vector<2x32xf32>
    %199 = vector.broadcast %cst_30 : f32 to vector<2x32xf32>
    %200 = arith.addf %198, %199 : vector<2x32xf32>
    %201 = vector.extract_strided_slice %195 {offsets = [0, 32], sizes = [2, 32], strides = [1, 1]} : vector<2x128xf32> to vector<2x32xf32>
    %202 = vector.broadcast %cst_30 : f32 to vector<2x32xf32>
    %203 = arith.mulf %201, %202 : vector<2x32xf32>
    %204 = vector.broadcast %cst_30 : f32 to vector<2x32xf32>
    %205 = arith.addf %203, %204 : vector<2x32xf32>
    %206 = vector.extract_strided_slice %195 {offsets = [0, 64], sizes = [2, 32], strides = [1, 1]} : vector<2x128xf32> to vector<2x32xf32>
    %207 = vector.extract_strided_slice %195 {offsets = [0, 96], sizes = [2, 32], strides = [1, 1]} : vector<2x128xf32> to vector<2x32xf32>
    %208 = vector.broadcast %cst_30 : f32 to vector<2x32xf32>
    %209 = arith.mulf %207, %208 : vector<2x32xf32>
    %210 = vector.broadcast %cst_30 : f32 to vector<2x32xf32>
    %211 = arith.addf %209, %210 : vector<2x32xf32>
    %212 = arith.mulf %205, %183 : vector<2x32xf32>
    %213 = arith.mulf %200, %206 : vector<2x32xf32>
    %214 = arith.addf %212, %213 : vector<2x32xf32>
    %215 = math.tanh %214 : vector<2x32xf32>
    %216 = arith.mulf %211, %215 : vector<2x32xf32>
    %217 = vector.shape_cast %216 : vector<2x32xf32> to vector<2x1x32xf32>
    %c0_60 = arith.constant 0 : index
    %218 = arith.index_cast %c5_i32 : i32 to index
    %c0_61 = arith.constant 0 : index
    %219 = vector.load %arg18[%c0_60, %218, %c0_61] : memref<2x8x32xf32, #tpu.memory_space<vmem>>, vector<2x1x32xf32>
    tpu.vector_store %arg18[%c0_60, %218, %c0_61], %217 {strides = array<i32>} : memref<2x8x32xf32, #tpu.memory_space<vmem>>, vector<2x1x32xf32>,
    %c6_i32 = arith.constant 6 : i32
    %c0_62 = arith.constant 0 : index
    %220 = arith.index_cast %c6_i32 : i32 to index
    %c0_63 = arith.constant 0 : index
    %221 = vector.load %arg17[%c0_62, %220, %c0_63] : memref<2x8x128xf32, #tpu.memory_space<vmem>>, vector<2x1x128xf32>
    %222 = vector.shape_cast %221 : vector<2x1x128xf32> to vector<2x128xf32>
    %cst_64 = arith.constant dense<0.000000e+00> : vector<2x128xf32>
    %223 = tpu.matmul %216, %22, %cst_64 {dimension_numbers = #tpu.dot_dimension_numbers<[1], [0], [0], [1], [0, 0, 1, 1], [], []>} : vector<2x32xf32>, vector<32x128xf32>, vector<2x128xf32> -> vector<2x128xf32>
    %224 = arith.addf %222, %223 : vector<2x128xf32>
    %225 = arith.mulf %224, %31 : vector<2x128xf32>
    %226 = math.tanh %225 : vector<2x128xf32>
    %227 = vector.extract_strided_slice %226 {offsets = [0, 0], sizes = [2, 32], strides = [1, 1]} : vector<2x128xf32> to vector<2x32xf32>
    %228 = vector.broadcast %cst_30 : f32 to vector<2x32xf32>
    %229 = arith.mulf %227, %228 : vector<2x32xf32>
    %230 = vector.broadcast %cst_30 : f32 to vector<2x32xf32>
    %231 = arith.addf %229, %230 : vector<2x32xf32>
    %232 = vector.extract_strided_slice %226 {offsets = [0, 32], sizes = [2, 32], strides = [1, 1]} : vector<2x128xf32> to vector<2x32xf32>
    %233 = vector.broadcast %cst_30 : f32 to vector<2x32xf32>
    %234 = arith.mulf %232, %233 : vector<2x32xf32>
    %235 = vector.broadcast %cst_30 : f32 to vector<2x32xf32>
    %236 = arith.addf %234, %235 : vector<2x32xf32>
    %237 = vector.extract_strided_slice %226 {offsets = [0, 64], sizes = [2, 32], strides = [1, 1]} : vector<2x128xf32> to vector<2x32xf32>
    %238 = vector.extract_strided_slice %226 {offsets = [0, 96], sizes = [2, 32], strides = [1, 1]} : vector<2x128xf32> to vector<2x32xf32>
    %239 = vector.broadcast %cst_30 : f32 to vector<2x32xf32>
    %240 = arith.mulf %238, %239 : vector<2x32xf32>
    %241 = vector.broadcast %cst_30 : f32 to vector<2x32xf32>
    %242 = arith.addf %240, %241 : vector<2x32xf32>
    %243 = arith.mulf %236, %214 : vector<2x32xf32>
    %244 = arith.mulf %231, %237 : vector<2x32xf32>
    %245 = arith.addf %243, %244 : vector<2x32xf32>
    %246 = math.tanh %245 : vector<2x32xf32>
    %247 = arith.mulf %242, %246 : vector<2x32xf32>
    %248 = vector.shape_cast %247 : vector<2x32xf32> to vector<2x1x32xf32>
    %c0_65 = arith.constant 0 : index
    %249 = arith.index_cast %c6_i32 : i32 to index
    %c0_66 = arith.constant 0 : index
    %250 = vector.load %arg18[%c0_65, %249, %c0_66] : memref<2x8x32xf32, #tpu.memory_space<vmem>>, vector<2x1x32xf32>
    tpu.vector_store %arg18[%c0_65, %249, %c0_66], %248 {strides = array<i32>} : memref<2x8x32xf32, #tpu.memory_space<vmem>>, vector<2x1x32xf32>,
    %c7_i32 = arith.constant 7 : i32
    %c0_67 = arith.constant 0 : index
    %251 = arith.index_cast %c7_i32 : i32 to index
    %c0_68 = arith.constant 0 : index
    %252 = vector.load %arg17[%c0_67, %251, %c0_68] : memref<2x8x128xf32, #tpu.memory_space<vmem>>, vector<2x1x128xf32>
    %253 = vector.shape_cast %252 : vector<2x1x128xf32> to vector<2x128xf32>
    %cst_69 = arith.constant dense<0.000000e+00> : vector<2x128xf32>
    %254 = tpu.matmul %247, %22, %cst_69 {dimension_numbers = #tpu.dot_dimension_numbers<[1], [0], [0], [1], [0, 0, 1, 1], [], []>} : vector<2x32xf32>, vector<32x128xf32>, vector<2x128xf32> -> vector<2x128xf32>
    %255 = arith.addf %253, %254 : vector<2x128xf32>
    %256 = arith.mulf %255, %31 : vector<2x128xf32>
    %257 = math.tanh %256 : vector<2x128xf32>
    %258 = vector.extract_strided_slice %257 {offsets = [0, 0], sizes = [2, 32], strides = [1, 1]} : vector<2x128xf32> to vector<2x32xf32>
    %259 = vector.broadcast %cst_30 : f32 to vector<2x32xf32>
    %260 = arith.mulf %258, %259 : vector<2x32xf32>
    %261 = vector.broadcast %cst_30 : f32 to vector<2x32xf32>
    %262 = arith.addf %260, %261 : vector<2x32xf32>
    %263 = vector.extract_strided_slice %257 {offsets = [0, 32], sizes = [2, 32], strides = [1, 1]} : vector<2x128xf32> to vector<2x32xf32>
    %264 = vector.broadcast %cst_30 : f32 to vector<2x32xf32>
    %265 = arith.mulf %263, %264 : vector<2x32xf32>
    %266 = vector.broadcast %cst_30 : f32 to vector<2x32xf32>
    %267 = arith.addf %265, %266 : vector<2x32xf32>
    %268 = vector.extract_strided_slice %257 {offsets = [0, 64], sizes = [2, 32], strides = [1, 1]} : vector<2x128xf32> to vector<2x32xf32>
    %269 = vector.extract_strided_slice %257 {offsets = [0, 96], sizes = [2, 32], strides = [1, 1]} : vector<2x128xf32> to vector<2x32xf32>
    %270 = vector.broadcast %cst_30 : f32 to vector<2x32xf32>
    %271 = arith.mulf %269, %270 : vector<2x32xf32>
    %272 = vector.broadcast %cst_30 : f32 to vector<2x32xf32>
    %273 = arith.addf %271, %272 : vector<2x32xf32>
    %274 = arith.mulf %267, %245 : vector<2x32xf32>
    %275 = arith.mulf %262, %268 : vector<2x32xf32>
    %276 = arith.addf %274, %275 : vector<2x32xf32>
    %277 = math.tanh %276 : vector<2x32xf32>
    %278 = arith.mulf %273, %277 : vector<2x32xf32>
    %279 = vector.shape_cast %278 : vector<2x32xf32> to vector<2x1x32xf32>
    %c0_70 = arith.constant 0 : index
    %280 = arith.index_cast %c7_i32 : i32 to index
    %c0_71 = arith.constant 0 : index
    %281 = vector.load %arg18[%c0_70, %280, %c0_71] : memref<2x8x32xf32, #tpu.memory_space<vmem>>, vector<2x1x32xf32>
    tpu.vector_store %arg18[%c0_70, %280, %c0_71], %279 {strides = array<i32>} : memref<2x8x32xf32, #tpu.memory_space<vmem>>, vector<2x1x32xf32>,
    %c8_i32 = arith.constant 8 : i32
    %c0_72 = arith.constant 0 : index
    %c0_73 = arith.constant 0 : index
    %282 = vector.load %arg15[%c0_72, %c0_73] : memref<2x32xf32, #tpu.memory_space<vmem>>, vector<2x32xf32>
    tpu.vector_store %arg15[%c0_72, %c0_73], %278 {strides = array<i32>} : memref<2x32xf32, #tpu.memory_space<vmem>>, vector<2x32xf32>,
    %c0_74 = arith.constant 0 : index
    %c0_75 = arith.constant 0 : index
    %283 = vector.load %arg16[%c0_74, %c0_75] : memref<2x32xf32, #tpu.memory_space<vmem>>, vector<2x32xf32>
    tpu.vector_store %arg16[%c0_74, %c0_75], %276 {strides = array<i32>} : memref<2x32xf32, #tpu.memory_space<vmem>>, vector<2x32xf32>,
    %c0_76 = arith.constant 0 : index
    %c0_77 = arith.constant 0 : index
    %c0_78 = arith.constant 0 : index
    %284 = vector.load %arg18[%c0_76, %c0_77, %c0_78] : memref<2x8x32xf32, #tpu.memory_space<vmem>>, vector<2x8x32xf32>
    %285 = vector.shape_cast %284 : vector<2x8x32xf32> to vector<2x256xf32>
    %c0_79 = arith.constant 0 : index
    %c0_80 = arith.constant 0 : index
    %286 = vector.load %arg12[%c0_79, %c0_80] : memref<2x256xf32, #tpu.memory_space<vmem>>, vector<2x256xf32>
    tpu.vector_store %arg12[%c0_79, %c0_80], %285 {strides = array<i32>} : memref<2x256xf32, #tpu.memory_space<vmem>>, vector<2x256xf32>,
    %c0_i32_81 = arith.constant 0 : i32
    %287 = arith.cmpi eq, %arg1, %c0_i32_81 : i32
    %288 = arith.extui %287 : i1 to i32
    %c0_i32_82 = arith.constant 0 : i32
    %289 = arith.cmpi ne, %288, %c0_i32_82 : i32
    scf.if %289 {
      %c0_83 = arith.constant 0 : index
      %c0_84 = arith.constant 0 : index
      %290 = vector.load %arg13[%c0_83, %c0_84] : memref<2x32xf32, #tpu.memory_space<vmem>>, vector<2x32xf32>
      tpu.vector_store %arg13[%c0_83, %c0_84], %278 {strides = array<i32>} : memref<2x32xf32, #tpu.memory_space<vmem>>, vector<2x32xf32>,
      %c0_85 = arith.constant 0 : index
      %c0_86 = arith.constant 0 : index
      %291 = vector.load %arg14[%c0_85, %c0_86] : memref<2x32xf32, #tpu.memory_space<vmem>>, vector<2x32xf32>
      tpu.vector_store %arg14[%c0_85, %c0_86], %276 {strides = array<i32>} : memref<2x32xf32, #tpu.memory_space<vmem>>, vector<2x32xf32>,
    } else {
    }
    return
  }
  func.func @transform_0(%arg0: i32, %arg1: i32) -> (i32, i32, i32) {
    %c0_i32 = arith.constant 0 : i32
    %c0_i32_0 = arith.constant 0 : i32
    return %arg0, %arg1, %c0_i32 : i32, i32, i32
  }
  func.func @transform_1(%arg0: i32, %arg1: i32) -> (i32, i32, i32) {
    %c0_i32 = arith.constant 0 : i32
    %c0_i32_0 = arith.constant 0 : i32
    return %arg0, %arg1, %c0_i32 : i32, i32, i32
  }
  func.func @transform_2(%arg0: i32, %arg1: i32) -> (i32, i32, i32) {
    %c0_i32 = arith.constant 0 : i32
    %c0_i32_0 = arith.constant 0 : i32
    return %arg0, %arg1, %c0_i32 : i32, i32, i32
  }
  func.func @transform_3(%arg0: i32, %arg1: i32) -> (i32, i32) {
    %c0_i32 = arith.constant 0 : i32
    %c0_i32_0 = arith.constant 0 : i32
    %c0_i32_1 = arith.constant 0 : i32
    return %c0_i32, %c0_i32_0 : i32, i32
  }
  func.func @transform_4(%arg0: i32, %arg1: i32) -> (i32, i32) {
    %c0_i32 = arith.constant 0 : i32
    %c0_i32_0 = arith.constant 0 : i32
    %c0_i32_1 = arith.constant 0 : i32
    return %c0_i32, %c0_i32_0 : i32, i32
  }
  func.func @transform_5(%arg0: i32, %arg1: i32) -> (i32, i32) {
    %c0_i32 = arith.constant 0 : i32
    %c0_i32_0 = arith.constant 0 : i32
    %c0_i32_1 = arith.constant 0 : i32
    return %c0_i32, %c0_i32_0 : i32, i32
  }
  func.func @transform_6(%arg0: i32, %arg1: i32) -> (i32, i32) {
    %c0_i32 = arith.constant 0 : i32
    %c0_i32_0 = arith.constant 0 : i32
    %c0_i32_1 = arith.constant 0 : i32
    return %c0_i32, %c0_i32_0 : i32, i32
  }
  func.func @transform_7(%arg0: i32, %arg1: i32) -> (i32, i32) {
    %c0_i32 = arith.constant 0 : i32
    %c0_i32_0 = arith.constant 0 : i32
    %c0_i32_1 = arith.constant 0 : i32
    return %c0_i32, %c0_i32_0 : i32, i32
  }
  func.func @transform_8(%arg0: i32, %arg1: i32) -> (i32, i32) {
    %c0_i32 = arith.constant 0 : i32
    %c0_i32_0 = arith.constant 0 : i32
    return %arg0, %c0_i32 : i32, i32
  }
  func.func @transform_9(%arg0: i32, %arg1: i32) -> (i32, i32) {
    %c0_i32 = arith.constant 0 : i32
    %c0_i32_0 = arith.constant 0 : i32
    return %arg0, %c0_i32 : i32, i32
  }
  func.func @transform_10(%arg0: i32, %arg1: i32) -> (i32, i32) {
    %c0_i32 = arith.constant 0 : i32
    return %arg0, %arg1 : i32, i32
  }
  func.func @transform_11(%arg0: i32, %arg1: i32) -> (i32, i32) {
    %c0_i32 = arith.constant 0 : i32
    %c0_i32_0 = arith.constant 0 : i32
    return %arg0, %c0_i32 : i32, i32
  }
  func.func @transform_12(%arg0: i32, %arg1: i32) -> (i32, i32) {
    %c0_i32 = arith.constant 0 : i32
    %c0_i32_0 = arith.constant 0 : i32
    return %arg0, %c0_i32 : i32, i32
  }
}

</mosaic_0001>

<llo_original>
// kernel: tpu_custom_call.1
$region0: #{tpu_custom_call.1}
  #allocation0 [shape = 'u32[]', space=smem, size = 0x4, offset = 0x4, fixed_abs, tag = 'smem constant byte address 0x4 - core index']
  #allocation1 [shape = 'u32[144,128]{1,0:T(1,128)}', space=vmem, size = 0x12000, scoped, tag = 'internal scratch']
  #allocation2 [shape = 'f32[2,32]{1,0:T(2,128)}', space=vmem, size = 0x400, scoped, tag = 'scratch operand']
  #allocation3 [shape = 'f32[2,32]{1,0:T(2,128)}', space=vmem, size = 0x400, scoped, tag = 'scratch operand']
  #allocation4 [shape = 'f32[2,8,128]{2,1,0:T(8,128)}', space=vmem, size = 0x2000, scoped, tag = 'scratch operand']
  #allocation5 [shape = 'f32[2,8,32]{2,1,0:T(8,128)}', space=vmem, size = 0x2000, scoped, tag = 'scratch operand']
  %s0 = inlined_call_operand.vmem [shape: f32[2,8,3], index: 0, kind: input, shape index: {}]
  %s1 = inlined_call_operand.hbm [shape: f32[2,8,13], index: 1, kind: input, shape index: {}]
  %s2 = inlined_call_operand.hbm [shape: f32[2,8,32], index: 2, kind: input, shape index: {}]
  %s3 = inlined_call_operand.vmem [shape: f32[3,128], index: 3, kind: input, shape index: {}]
  %s4 = inlined_call_operand.hbm [shape: f32[13,128], index: 4, kind: input, shape index: {}]
  %s5 = inlined_call_operand.vmem [shape: f32[32,128], index: 5, kind: input, shape index: {}]
  %s6 = inlined_call_operand.hbm [shape: f32[32,128], index: 6, kind: input, shape index: {}]
  %s7 = inlined_call_operand.vmem [shape: f32[1,128], index: 7, kind: input, shape index: {}]
  %s8 = inlined_call_operand.vmem [shape: f32[2,32], index: 8, kind: input, shape index: {}]
  %s9 = inlined_call_operand.vmem [shape: f32[2,32], index: 9, kind: input, shape index: {}]
  %s10 = inlined_call_operand.hbm [shape: f32[2,256], index: 10, kind: output, shape index: {0}]
  %s11 = inlined_call_operand.hbm [shape: f32[2,32], index: 11, kind: output, shape index: {1}]
  %s12 = inlined_call_operand.hbm [shape: f32[2,32], index: 12, kind: output, shape index: {2}]
  %13 = xla_tuple %s10, %s11, %s12
  %s14 = sld [smem:[#allocation0]]
  $region90: #{tpu_custom_call.1} parent=0
    _
  %s16 = ssub.s32 1, %s14
  %s17 = scalar_select 0, %s16, %s14
  $region1: #{tpu_custom_call.1} parent=0
    #allocation6 [shape = 'u8[8192]{0}', space=vmem, size = 0x2000, scoped, tag = 'input window, operand 1, single buffered']
    #allocation7 [shape = 's32[1]{0}', space=sflag, size = 0x4, scoped, tag = 'scoped memory for tpu_custom_call.1']
    #allocation8 [shape = 's32[1]{0}', space=sflag, size = 0x4, scoped, tag = 'scoped memory for tpu_custom_call.1']
    #allocation9 [shape = 'u8[8192]{0}', space=vmem, size = 0x2000, scoped, tag = 'input window, operand 2, single buffered']
    #allocation10 [shape = 's32[1]{0}', space=sflag, size = 0x4, scoped, tag = 'scoped memory for tpu_custom_call.1']
    #allocation11 [shape = 'u8[8192]{0}', space=vmem, size = 0x2000, scoped, tag = 'input window, operand 4, single buffered']
    #allocation12 [shape = 'u8[16384]{0}', space=vmem, size = 0x4000, scoped, tag = 'input window, operand 6, single buffered']
    #allocation13 [shape = 's32[1]{0}', space=sflag, size = 0x4, scoped, tag = 'scoped memory for tpu_custom_call.1']
    #allocation14 [shape = 'u8[2048]{0}', space=vmem, size = 0x800, scoped, tag = 'output window, operand 0, single buffered']
    #allocation15 [shape = 'u8[1024]{0}', space=vmem, size = 0x400, scoped, tag = 'output window, operand 1, single buffered']
    #allocation16 [shape = 's32[1]{0}', space=sflag, size = 0x4, scoped, tag = 'scoped memory for tpu_custom_call.1']
    #allocation17 [shape = 'u8[1024]{0}', space=vmem, size = 0x400, scoped, tag = 'output window, operand 2, single buffered']
    %18 = vsyncpa [#allocation7], 0
    %19 = vsyncpa [#allocation10], 0
    %20 = vsyncpa [#allocation13], 0
    %21 = vsyncpa [#allocation8], 0
    %22 = vsyncpa [#allocation16], 0
    // Predicated region
    $region2: #{tpu_custom_call.1} parent=1 // pred_check
      _
    $region3: #{tpu_custom_call.1} parent=1 // pred_check_branch
      %24 = sbr.rel (0) target = $region5
    $region4: #{tpu_custom_call.1} parent=1 // pred_region
      _
    $region5: #{tpu_custom_call.1} parent=1 // pred_fallthru
      _
    // Predicated region
    $region6: #{tpu_custom_call.1} parent=1 // pred_check
      _
    $region7: #{tpu_custom_call.1} parent=1 // pred_check_branch
      %26 = sbr.rel (0) target = $region9
    $region8: #{tpu_custom_call.1} parent=1 // pred_region
      %s28 = ssub.s32 256, 256
      %29 = vsyncadd [#allocation7], %s28
      %s30 = sshll.u32 [#allocation6], 4
      %s31 = int_to_ptr.vmem [resolvable:$true] %s30
      %36 = dma.hbm_to_vmem [thread:$0]  %s1, 256, %s31, [#allocation7], 128, 128, 8
    $region9: #{tpu_custom_call.1} parent=1 // pred_fallthru
      _
    // Predicated region
    $region10: #{tpu_custom_call.1} parent=1 // pred_check
      _
    $region11: #{tpu_custom_call.1} parent=1 // pred_check_branch
      %38 = sbr.rel (0) target = $region13
    $region12: #{tpu_custom_call.1} parent=1 // pred_region
      %s40 = ssub.s32 256, 256
      %41 = vsyncadd [#allocation10], %s40
      %s42 = sshll.u32 [#allocation9], 4
      %s43 = int_to_ptr.vmem [resolvable:$true] %s42
      %48 = dma.hbm_to_vmem [thread:$0]  %s2, 256, %s43, [#allocation10], 128, 128, 8
    $region13: #{tpu_custom_call.1} parent=1 // pred_fallthru
      _
    // Predicated region
    $region14: #{tpu_custom_call.1} parent=1 // pred_check
      _
    $region15: #{tpu_custom_call.1} parent=1 // pred_check_branch
      %50 = sbr.rel (0) target = $region17
    $region16: #{tpu_custom_call.1} parent=1 // pred_region
      _
    $region17: #{tpu_custom_call.1} parent=1 // pred_fallthru
      _
    // Predicated region
    $region18: #{tpu_custom_call.1} parent=1 // pred_check
      _
    $region19: #{tpu_custom_call.1} parent=1 // pred_check_branch
      %52 = sbr.rel (0) target = $region21
    $region20: #{tpu_custom_call.1} parent=1 // pred_region
      %s54 = ssub.s32 256, 256
      %55 = vsyncadd [#allocation10], %s54
      %s56 = sshll.u32 [#allocation11], 4
      %s57 = int_to_ptr.vmem [resolvable:$true] %s56
      %62 = dma.hbm_to_vmem [thread:$0]  %s4, 256, %s57, [#allocation10], 128, 128, 8
    $region21: #{tpu_custom_call.1} parent=1 // pred_fallthru
      _
    // Predicated region
    $region22: #{tpu_custom_call.1} parent=1 // pred_check
      _
    $region23: #{tpu_custom_call.1} parent=1 // pred_check_branch
      %64 = sbr.rel (0) target = $region25
    $region24: #{tpu_custom_call.1} parent=1 // pred_region
      _
    $region25: #{tpu_custom_call.1} parent=1 // pred_fallthru
      _
    // Predicated region
    $region26: #{tpu_custom_call.1} parent=1 // pred_check
      _
    $region27: #{tpu_custom_call.1} parent=1 // pred_check_branch
      %66 = sbr.rel (0) target = $region29
    $region28: #{tpu_custom_call.1} parent=1 // pred_region
      %s68 = ssub.s32 512, 512
      %69 = vsyncadd [#allocation13], %s68
      %s70 = sshll.u32 [#allocation12], 4
      %s71 = int_to_ptr.vmem [resolvable:$true] %s70
      %76 = dma.hbm_to_vmem [thread:$0]  %s6, 512, %s71, [#allocation13], 128, 128, 8
    $region29: #{tpu_custom_call.1} parent=1 // pred_fallthru
      _
    // Predicated region
    $region30: #{tpu_custom_call.1} parent=1 // pred_check
      _
    $region31: #{tpu_custom_call.1} parent=1 // pred_check_branch
      %78 = sbr.rel (0) target = $region33
    $region32: #{tpu_custom_call.1} parent=1 // pred_region
      _
    $region33: #{tpu_custom_call.1} parent=1 // pred_fallthru
      _
    // Predicated region
    $region34: #{tpu_custom_call.1} parent=1 // pred_check
      _
    $region35: #{tpu_custom_call.1} parent=1 // pred_check_branch
      %80 = sbr.rel (0) target = $region37
    $region36: #{tpu_custom_call.1} parent=1 // pred_region
      _
    $region37: #{tpu_custom_call.1} parent=1 // pred_fallthru
      _
    // Predicated region
    $region38: #{tpu_custom_call.1} parent=1 // pred_check
      _
    $region39: #{tpu_custom_call.1} parent=1 // pred_check_branch
      %82 = sbr.rel (0) target = $region41
    $region40: #{tpu_custom_call.1} parent=1 // pred_region
      _
    $region41: #{tpu_custom_call.1} parent=1 // pred_fallthru
      _
    // Predicated region
    $region42: #{tpu_custom_call.1} parent=1 // pred_check
      _
    $region43: #{tpu_custom_call.1} parent=1 // pred_check_branch
      %84 = sbr.rel (0) target = $region45
    $region44: #{tpu_custom_call.1} parent=1 // pred_region
      %85 = dma.done [#allocation7], 256
    $region45: #{tpu_custom_call.1} parent=1 // pred_fallthru
      _
    // Predicated region
    $region46: #{tpu_custom_call.1} parent=1 // pred_check
      _
    $region47: #{tpu_custom_call.1} parent=1 // pred_check_branch
      %87 = sbr.rel (0) target = $region49
    $region48: #{tpu_custom_call.1} parent=1 // pred_region
      %88 = dma.done [#allocation10], 256
    $region49: #{tpu_custom_call.1} parent=1 // pred_fallthru
      _
    // Predicated region
    $region50: #{tpu_custom_call.1} parent=1 // pred_check
      _
    $region51: #{tpu_custom_call.1} parent=1 // pred_check_branch
      %90 = sbr.rel (0) target = $region53
    $region52: #{tpu_custom_call.1} parent=1 // pred_region
      %91 = dma.done [#allocation10], 256
    $region53: #{tpu_custom_call.1} parent=1 // pred_fallthru
      _
    // Predicated region
    $region54: #{tpu_custom_call.1} parent=1 // pred_check
      _
    $region55: #{tpu_custom_call.1} parent=1 // pred_check_branch
      %93 = sbr.rel (0) target = $region57
    $region56: #{tpu_custom_call.1} parent=1 // pred_region
      %94 = dma.done [#allocation13], 512
    $region57: #{tpu_custom_call.1} parent=1 // pred_fallthru
      _
    %p95 = scmp.eq.s32.totalorder 0, 0
    // Predicated region
    $region58: #{tpu_custom_call.1} parent=1 // pred_check
      %p96 = pneg %p95
    $region59: #{tpu_custom_call.1} parent=1 // pred_check_branch
      %98 = sbr.rel (%p96) target = $region61
    $region60: #{tpu_custom_call.1} parent=1 // pred_region
      %v99 = vld [vmem:[%s8] sm:$0x3]
      %vm100 = vcmask 254976
      %101 = vst.msk [vmem:[#allocation2] sm:$0x3] %vm100, %v99
      %v102 = vld [vmem:[%s9] sm:$0x3]
      %103 = vst.msk [vmem:[#allocation3] sm:$0x3] %vm100, %v102
    $region61: #{tpu_custom_call.1} parent=1 // pred_fallthru
      _
    %v104 = vld [vmem:[%s0] sm:$0xff]
    %v105 = vld [vmem:[%s0 + $0x8] sm:$0xff]
    %v106 = vld [vmem:[%s3] sm:$0x7]
    %v107 = vld [vmem:[#allocation6] sm:$0xff]
    %v108 = vld [vmem:[#allocation6 + $0x8] sm:$0xff]
    %v109 = vld [vmem:[#allocation11] sm:$0xff]
    %v110 = vld [vmem:[#allocation11 + $0x8] sm:$0x1f]
    %vm111 = vcmask 105472
    %v113 = vsel %vm111, %v107, 0
    %v116 = vsel %vm111, %v108, 0
    %vm118 = vcmask 1044480
    %v120 = vsel %vm118, %v110, 0
    %122 = vmatprep.subr.mxu0 0.0
    %123 = vmatpush1.msra.mxu0 %v109
    %124 = vmatprep.subr.mxu0 0.0
    %125 = vmatpush1.msra.mxu0 %v120
    %126 = vmatprep.subr.mxu0 0.0
    %127 = vmatpush1.msra.mxu0 0.0
    %128 = vmatprep.subr.mxu0 0.0
    %129 = vmatpush1.msra.mxu0 0.0
    %130 = vmatprep.subr.mxu0 0.0
    %131 = vmatpush1.msra.mxu0 0.0
    %132 = vmatprep.subr.mxu0 0.0
    %133 = vmatpush1.msra.mxu0 0.0
    %134 = vmatprep.subr.mxu0 0.0
    %135 = vmatpush1.msra.mxu0 0.0
    %136 = vmatprep.subr.mxu0 0.0
    %137 = vmatpush1.msra.mxu0 0.0
    %138 = vmatprep.subr.mxu0 0.0
    %139 = vmatpush1.msra.mxu0 0.0
    %140 = vmatprep.subr.mxu0 0.0
    %141 = vmatpush1.msra.mxu0 0.0
    %142 = vmatprep.subr.mxu0 0.0
    %143 = vmatpush1.msra.mxu0 0.0
    %144 = vmatprep.subr.mxu0 0.0
    %145 = vmatpush1.msra.mxu0 0.0
    %146 = vmatprep.subr.mxu0 0.0
    %147 = vmatpush1.msra.mxu0 0.0
    %148 = vmatprep.subr.mxu0 0.0
    %149 = vmatpush1.msra.mxu0 0.0
    %150 = vmatprep.subr.mxu0 0.0
    %151 = vmatpush1.msra.mxu0 0.0
    %152 = vmatprep.subr.mxu0 0.0
    %153 = vmatpush1.msra.mxu0 0.0
    %154 = vmatprep.subr.mxu0 0.0
    %155 = vmatpush1.msra.mxu0 0.0
    %156 = vmatprep.subr.mxu0 0.0
    %157 = vmatpush1.msra.mxu0 0.0
    %158 = vmatprep.subr.mxu0 0.0
    %159 = vmatpush1.msra.mxu0 0.0
    %160 = vmatprep.subr.mxu0 0.0
    %161 = vmatpush1.msra.mxu0 0.0
    %162 = vmatprep.subr.mxu0 0.0
    %163 = vmatpush1.msra.mxu0 0.0
    %164 = vmatprep.subr.mxu0 0.0
    %165 = vmatpush1.msra.mxu0 0.0
    %166 = vmatprep.subr.mxu0 0.0
    %167 = vmatpush1.msra.mxu0 0.0
    %168 = vmatprep.subr.mxu0 0.0
    %169 = vmatpush1.msra.mxu0 0.0
    %170 = vmatprep.subr.mxu0 0.0
    %171 = vmatpush1.msra.mxu0 0.0
    %172 = vmatprep.subr.mxu0 0.0
    %173 = vmatpush1.msra.mxu0 0.0
    %174 = vmatprep.subr.mxu0 0.0
    %175 = vmatpush1.msra.mxu0 0.0
    %176 = vmatprep.subr.mxu0 0.0
    %177 = vmatpush1.msra.mxu0 0.0
    %178 = vmatprep.subr.mxu0 0.0
    %179 = vmatpush1.msra.mxu0 0.0
    %180 = vmatprep.subr.mxu0 0.0
    %181 = vmatpush1.msra.mxu0 0.0
    %182 = vmatprep.subr.mxu0 0.0
    %183 = vmatpush1.msra.mxu0 0.0
    %184 = vmatprep.subr.mxu0 0.0
    %185 = vmatpush1.msra.mxu0 0.0
    %186 = vmatprep.mubr.f32.mxu0 0.0
    %187 = vmatmul.mubr.f32.gmra.mrb[0].mxu0 %v113
    %v188 = vpop.f32.mrb[0].mxu0
    %v189 = vadd.f32 0.0, %v188
    %v190 = vpop.f32.mrb[0].mxu0
    %191 = vmatprep.mubr.f32.mxu0 0.0
    %192 = vmatmul.mubr.f32.gmra.mrb[0].mxu0 %v116
    %v193 = vpop.f32.mrb[0].mxu0
    %v194 = vadd.f32 0.0, %v193
    %v195 = vpop.f32.mrb[0].mxu0
    %196 = vdwg.mxu0
    %vm197 = vcmask 23552
    %v199 = vsel %vm197, %v104, 0
    %v202 = vsel %vm197, %v105, 0
    %vm204 = vcmask 1042432
    %v206 = vsel %vm204, %v106, 0
    %208 = vmatprep.subr.mxu0 0.0
    %209 = vmatpush1.msra.mxu0 %v206
    %210 = vmatprep.subr.mxu0 0.0
    %211 = vmatpush1.msra.mxu0 0.0
    %212 = vmatprep.subr.mxu0 0.0
    %213 = vmatpush1.msra.mxu0 0.0
    %214 = vmatprep.subr.mxu0 0.0
    %215 = vmatpush1.msra.mxu0 0.0
    %216 = vmatprep.subr.mxu0 0.0
    %217 = vmatpush1.msra.mxu0 0.0
    %218 = vmatprep.subr.mxu0 0.0
    %219 = vmatpush1.msra.mxu0 0.0
    %220 = vmatprep.subr.mxu0 0.0
    %221 = vmatpush1.msra.mxu0 0.0
    %222 = vmatprep.subr.mxu0 0.0
    %223 = vmatpush1.msra.mxu0 0.0
    %224 = vmatprep.subr.mxu0 0.0
    %225 = vmatpush1.msra.mxu0 0.0
    %226 = vmatprep.subr.mxu0 0.0
    %227 = vmatpush1.msra.mxu0 0.0
    %228 = vmatprep.subr.mxu0 0.0
    %229 = vmatpush1.msra.mxu0 0.0
    %230 = vmatprep.subr.mxu0 0.0
    %231 = vmatpush1.msra.mxu0 0.0
    %232 = vmatprep.subr.mxu0 0.0
    %233 = vmatpush1.msra.mxu0 0.0
    %234 = vmatprep.subr.mxu0 0.0
    %235 = vmatpush1.msra.mxu0 0.0
    %236 = vmatprep.subr.mxu0 0.0
    %237 = vmatpush1.msra.mxu0 0.0
    %238 = vmatprep.subr.mxu0 0.0
    %239 = vmatpush1.msra.mxu0 0.0
    %240 = vmatprep.subr.mxu0 0.0
    %241 = vmatpush1.msra.mxu0 0.0
    %242 = vmatprep.subr.mxu0 0.0
    %243 = vmatpush1.msra.mxu0 0.0
    %244 = vmatprep.subr.mxu0 0.0
    %245 = vmatpush1.msra.mxu0 0.0
    %246 = vmatprep.subr.mxu0 0.0
    %247 = vmatpush1.msra.mxu0 0.0
    %248 = vmatprep.subr.mxu0 0.0
    %249 = vmatpush1.msra.mxu0 0.0
    %250 = vmatprep.subr.mxu0 0.0
    %251 = vmatpush1.msra.mxu0 0.0
    %252 = vmatprep.subr.mxu0 0.0
    %253 = vmatpush1.msra.mxu0 0.0
    %254 = vmatprep.subr.mxu0 0.0
    %255 = vmatpush1.msra.mxu0 0.0
    %256 = vmatprep.subr.mxu0 0.0
    %257 = vmatpush1.msra.mxu0 0.0
    %258 = vmatprep.subr.mxu0 0.0
    %259 = vmatpush1.msra.mxu0 0.0
    %260 = vmatprep.subr.mxu0 0.0
    %261 = vmatpush1.msra.mxu0 0.0
    %262 = vmatprep.subr.mxu0 0.0
    %263 = vmatpush1.msra.mxu0 0.0
    %264 = vmatprep.subr.mxu0 0.0
    %265 = vmatpush1.msra.mxu0 0.0
    %266 = vmatprep.subr.mxu0 0.0
    %267 = vmatpush1.msra.mxu0 0.0
    %268 = vmatprep.subr.mxu0 0.0
    %269 = vmatpush1.msra.mxu0 0.0
    %270 = vmatprep.subr.mxu0 0.0
    %271 = vmatpush1.msra.mxu0 0.0
    %272 = vmatprep.mubr.f32.mxu0 0.0
    %273 = vmatmul.mubr.f32.gmra.mrb[0].mxu0 %v199
    %v274 = vpop.f32.mrb[0].mxu0
    %v275 = vadd.f32 %v189, %v274
    %v276 = vpop.f32.mrb[0].mxu0
    %277 = vmatprep.mubr.f32.mxu0 0.0
    %278 = vmatmul.mubr.f32.gmra.mrb[0].mxu0 %v202
    %v279 = vpop.f32.mrb[0].mxu0
    %v280 = vadd.f32 %v194, %v279
    %v281 = vpop.f32.mrb[0].mxu0
    %282 = vdwg.mxu0
    %v283 = vld [vmem:[#allocation9] sm:$0xff]
    %v284 = vld [vmem:[#allocation9 + $0x8] sm:$0xff]
    %v285 = vld [vmem:[%s5] sm:$0xff]
    %v286 = vld [vmem:[%s5 + $0x8] sm:$0xff]
    %v287 = vld [vmem:[%s5 + $0x10] sm:$0xff]
    %v288 = vld [vmem:[%s5 + $0x18] sm:$0xff]
    %vm289 = vcmask 261120
    %v291 = vsel %vm289, %v283, 0
    %v294 = vsel %vm289, %v284, 0
    %296 = vmatprep.subr.mxu0 0.0
    %297 = vmatpush1.msra.mxu0 %v285
    %298 = vmatprep.subr.mxu0 0.0
    %299 = vmatpush1.msra.mxu0 %v286
    %300 = vmatprep.subr.mxu0 0.0
    %301 = vmatpush1.msra.mxu0 %v287
    %302 = vmatprep.subr.mxu0 0.0
    %303 = vmatpush1.msra.mxu0 %v288
    %304 = vmatprep.subr.mxu0 0.0
    %305 = vmatpush1.msra.mxu0 0.0
    %306 = vmatprep.subr.mxu0 0.0
    %307 = vmatpush1.msra.mxu0 0.0
    %308 = vmatprep.subr.mxu0 0.0
    %309 = vmatpush1.msra.mxu0 0.0
    %310 = vmatprep.subr.mxu0 0.0
    %311 = vmatpush1.msra.mxu0 0.0
    %312 = vmatprep.subr.mxu0 0.0
    %313 = vmatpush1.msra.mxu0 0.0
    %314 = vmatprep.subr.mxu0 0.0
    %315 = vmatpush1.msra.mxu0 0.0
    %316 = vmatprep.subr.mxu0 0.0
    %317 = vmatpush1.msra.mxu0 0.0
    %318 = vmatprep.subr.mxu0 0.0
    %319 = vmatpush1.msra.mxu0 0.0
    %320 = vmatprep.subr.mxu0 0.0
    %321 = vmatpush1.msra.mxu0 0.0
    %322 = vmatprep.subr.mxu0 0.0
    %323 = vmatpush1.msra.mxu0 0.0
    %324 = vmatprep.subr.mxu0 0.0
    %325 = vmatpush1.msra.mxu0 0.0
    %326 = vmatprep.subr.mxu0 0.0
    %327 = vmatpush1.msra.mxu0 0.0
    %328 = vmatprep.subr.mxu0 0.0
    %329 = vmatpush1.msra.mxu0 0.0
    %330 = vmatprep.subr.mxu0 0.0
    %331 = vmatpush1.msra.mxu0 0.0
    %332 = vmatprep.subr.mxu0 0.0
    %333 = vmatpush1.msra.mxu0 0.0
    %334 = vmatprep.subr.mxu0 0.0
    %335 = vmatpush1.msra.mxu0 0.0
    %336 = vmatprep.subr.mxu0 0.0
    %337 = vmatpush1.msra.mxu0 0.0
    %338 = vmatprep.subr.mxu0 0.0
    %339 = vmatpush1.msra.mxu0 0.0
    %340 = vmatprep.subr.mxu0 0.0
    %341 = vmatpush1.msra.mxu0 0.0
    %342 = vmatprep.subr.mxu0 0.0
    %343 = vmatpush1.msra.mxu0 0.0
    %344 = vmatprep.subr.mxu0 0.0
    %345 = vmatpush1.msra.mxu0 0.0
    %346 = vmatprep.subr.mxu0 0.0
    %347 = vmatpush1.msra.mxu0 0.0
    %348 = vmatprep.subr.mxu0 0.0
    %349 = vmatpush1.msra.mxu0 0.0
    %350 = vmatprep.subr.mxu0 0.0
    %351 = vmatpush1.msra.mxu0 0.0
    %352 = vmatprep.subr.mxu0 0.0
    %353 = vmatpush1.msra.mxu0 0.0
    %354 = vmatprep.subr.mxu0 0.0
    %355 = vmatpush1.msra.mxu0 0.0
    %356 = vmatprep.subr.mxu0 0.0
    %357 = vmatpush1.msra.mxu0 0.0
    %358 = vmatprep.subr.mxu0 0.0
    %359 = vmatpush1.msra.mxu0 0.0
    %360 = vmatprep.mubr.f32.mxu0 0.0
    %361 = vmatmul.mubr.f32.gmra.mrb[0].mxu0 %v291
    %v362 = vpop.f32.mrb[0].mxu0
    %v363 = vadd.f32 0.0, %v362
    %v364 = vpop.f32.mrb[0].mxu0
    %365 = vmatprep.mubr.f32.mxu0 0.0
    %366 = vmatmul.mubr.f32.gmra.mrb[0].mxu0 %v294
    %v367 = vpop.f32.mrb[0].mxu0
    %v368 = vadd.f32 0.0, %v367
    %v369 = vpop.f32.mrb[0].mxu0
    %370 = vdwg.mxu0
    %v371 = vadd.f32 %v275, %v363
    %v372 = vadd.f32 %v280, %v368
    %v373 = vld [vmem:[%s7] sm:$0x1]
    %v375 = vlaneseq
    %v376 = vshrl.u32 %v375, 7
    %v377 = vsub.s32 0, %v376
    %v378 = vrot.slane %v373, %v377
    %v380 = vadd.f32 %v371, %v378
    %v381 = vadd.f32 %v372, %v378
    %382 = vst [vmem:[#allocation4] sm:$0xff] %v380
    %383 = vst [vmem:[#allocation4 + $0x8] sm:$0xff] %v381
    %v384 = vld [vmem:[#allocation12] sm:$0xff]
    %v385 = vld [vmem:[#allocation12 + $0x8] sm:$0xff]
    %v386 = vld [vmem:[#allocation12 + $0x10] sm:$0xff]
    %v387 = vld [vmem:[#allocation12 + $0x18] sm:$0xff]
    %v388 = vlaneseq
    %v389 = vand.u32 %v388, 127
    %vm390 = vcmp.ge.s32.totalorder %v389, 64
    %vm391 = vcmp.lt.s32.totalorder %v389, 96
    %vm392 = vmand %vm390, %vm391
    %v393 = vsel %vm392, 1.0, 0.5
    %v394 = vld [vmem:[#allocation2] sm:$0x3]
    %v395 = vld [vmem:[#allocation3] sm:$0x3]
    %v396 = vld [vmem:[#allocation4] sm:$0x1]
    %v397 = vld [vmem:[#allocation4 + $0x8] sm:$0x1]
    %v399 = vsel %vm289, %v394, 0
    %401 = vmatprep.subr.mxu0 0.0
    %402 = vmatpush1.msra.mxu0 %v384
    %403 = vmatprep.subr.mxu0 0.0
    %404 = vmatpush1.msra.mxu0 %v385
    %405 = vmatprep.subr.mxu0 0.0
    %406 = vmatpush1.msra.mxu0 %v386
    %407 = vmatprep.subr.mxu0 0.0
    %408 = vmatpush1.msra.mxu0 %v387
    %409 = vmatprep.subr.mxu0 0.0
    %410 = vmatpush1.msra.mxu0 0.0
    %411 = vmatprep.subr.mxu0 0.0
    %412 = vmatpush1.msra.mxu0 0.0
    %413 = vmatprep.subr.mxu0 0.0
    %414 = vmatpush1.msra.mxu0 0.0
    %415 = vmatprep.subr.mxu0 0.0
    %416 = vmatpush1.msra.mxu0 0.0
    %417 = vmatprep.subr.mxu0 0.0
    %418 = vmatpush1.msra.mxu0 0.0
    %419 = vmatprep.subr.mxu0 0.0
    %420 = vmatpush1.msra.mxu0 0.0
    %421 = vmatprep.subr.mxu0 0.0
    %422 = vmatpush1.msra.mxu0 0.0
    %423 = vmatprep.subr.mxu0 0.0
    %424 = vmatpush1.msra.mxu0 0.0
    %425 = vmatprep.subr.mxu0 0.0
    %426 = vmatpush1.msra.mxu0 0.0
    %427 = vmatprep.subr.mxu0 0.0
    %428 = vmatpush1.msra.mxu0 0.0
    %429 = vmatprep.subr.mxu0 0.0
    %430 = vmatpush1.msra.mxu0 0.0
    %431 = vmatprep.subr.mxu0 0.0
    %432 = vmatpush1.msra.mxu0 0.0
    %433 = vmatprep.subr.mxu0 0.0
    %434 = vmatpush1.msra.mxu0 0.0
    %435 = vmatprep.subr.mxu0 0.0
    %436 = vmatpush1.msra.mxu0 0.0
    %437 = vmatprep.subr.mxu0 0.0
    %438 = vmatpush1.msra.mxu0 0.0
    %439 = vmatprep.subr.mxu0 0.0
    %440 = vmatpush1.msra.mxu0 0.0
    %441 = vmatprep.subr.mxu0 0.0
    %442 = vmatpush1.msra.mxu0 0.0
    %443 = vmatprep.subr.mxu0 0.0
    %444 = vmatpush1.msra.mxu0 0.0
    %445 = vmatprep.subr.mxu0 0.0
    %446 = vmatpush1.msra.mxu0 0.0
    %447 = vmatprep.subr.mxu0 0.0
    %448 = vmatpush1.msra.mxu0 0.0
    %449 = vmatprep.subr.mxu0 0.0
    %450 = vmatpush1.msra.mxu0 0.0
    %451 = vmatprep.subr.mxu0 0.0
    %452 = vmatpush1.msra.mxu0 0.0
    %453 = vmatprep.subr.mxu0 0.0
    %454 = vmatpush1.msra.mxu0 0.0
    %455 = vmatprep.subr.mxu0 0.0
    %456 = vmatpush1.msra.mxu0 0.0
    %457 = vmatprep.subr.mxu0 0.0
    %458 = vmatpush1.msra.mxu0 0.0
    %459 = vmatprep.subr.mxu0 0.0
    %460 = vmatpush1.msra.mxu0 0.0
    %461 = vmatprep.subr.mxu0 0.0
    %462 = vmatpush1.msra.mxu0 0.0
    %463 = vmatprep.subr.mxu0 0.0
    %464 = vmatpush1.msra.mxu0 0.0
    %465 = vmatprep.mubr.f32.mxu0 0.0
    %466 = vmatmul.mubr.f32.gmra.mrb[0].mxu0 %v399
    %v467 = vpop.f32.mrb[0].mxu0
    %v468 = vadd.f32 0.0, %v467
    %v469 = vpop.f32.mrb[0].mxu0
    %470 = vdwg.mxu0
    %v472 = vrot.slane %v468, 1
    %v475 = vadd.f32 %v396, %v468
    %v476 = vadd.f32 %v397, %v472
    %v477 = vmul.f32 %v475, %v393
    %v478 = vmul.f32 %v476, %v393
    %v479 = vtanh.pop %v477
    %v480 = vtanh.pop %v478
    %v481 = vmul.f32 %v479, 0.5
    %v482 = vmul.f32 %v480, 0.5
    %v483 = vadd.f32 %v481, 0.5
    %v484 = vadd.f32 %v482, 0.5
    %v486 = vrot.slane %v395, 1
    %487 = vrot.lane.b32.xlu0 %v395, 32
    %v488 = vpop.permute.xlu0 %487
    %489 = vrot.lane.b32.xlu0 %v486, 32
    %v490 = vpop.permute.xlu0 %489
    %v493 = vmul.f32 %v483, %v488
    %v494 = vmul.f32 %v484, %v490
    %497 = vrot.lane.b32.xlu0 %v479, 64
    %v498 = vpop.permute.xlu0 %497
    %499 = vrot.lane.b32.xlu0 %v480, 64
    %v500 = vpop.permute.xlu0 %499
    %v503 = vmul.f32 %v483, %v498
    %v504 = vmul.f32 %v484, %v500
    %507 = vrot.lane.b32.xlu0 %v503, 32
    %v508 = vpop.permute.xlu0 %507
    %509 = vrot.lane.b32.xlu0 %v504, 32
    %v510 = vpop.permute.xlu0 %509
    %v513 = vadd.f32 %v493, %v508
    %v514 = vadd.f32 %v494, %v510
    %v515 = vtanh.pop %v513
    %v516 = vtanh.pop %v514
    %519 = vrot.lane.b32.xlu0 %v515, 64
    %v520 = vpop.permute.xlu0 %519
    %521 = vrot.lane.b32.xlu0 %v516, 64
    %v522 = vpop.permute.xlu0 %521
    %v525 = vmul.f32 %v483, %v520
    %v526 = vmul.f32 %v484, %v522
    %529 = vrot.lane.b32.xlu0 %v525, 32
    %v530 = vpop.permute.xlu0 %529
    %531 = vrot.lane.b32.xlu0 %v526, 32
    %v532 = vpop.permute.xlu0 %531
    %vm535 = vcmask 253952
    %536 = vst.msk [vmem:[#allocation5] sm:$0x1] %vm535, %v530
    %537 = vst.msk [vmem:[#allocation5 + $0x8] sm:$0x1] %vm535, %v532
    %v538 = vld [vmem:[#allocation4 + $0x1] sm:$0x1]
    %v539 = vld [vmem:[#allocation4 + $0x9] sm:$0x1]
    %v540 = vrot.slane %v526, 7
    %vm541 = vcmask 1041409
    %v542 = vsel %vm541, %v540, %v525
    %543 = vrot.lane.b32.xlu0 %v542, 32
    %v544 = vpop.permute.xlu0 %543
    %v545 = vsel %vm289, %v544, 0
    %547 = vmatprep.subr.mxu0 0.0
    %548 = vmatpush1.msra.mxu0 %v384
    %549 = vmatprep.subr.mxu0 0.0
    %550 = vmatpush1.msra.mxu0 %v385
    %551 = vmatprep.subr.mxu0 0.0
    %552 = vmatpush1.msra.mxu0 %v386
    %553 = vmatprep.subr.mxu0 0.0
    %554 = vmatpush1.msra.mxu0 %v387
    %555 = vmatprep.subr.mxu0 0.0
    %556 = vmatpush1.msra.mxu0 0.0
    %557 = vmatprep.subr.mxu0 0.0
    %558 = vmatpush1.msra.mxu0 0.0
    %559 = vmatprep.subr.mxu0 0.0
    %560 = vmatpush1.msra.mxu0 0.0
    %561 = vmatprep.subr.mxu0 0.0
    %562 = vmatpush1.msra.mxu0 0.0
    %563 = vmatprep.subr.mxu0 0.0
    %564 = vmatpush1.msra.mxu0 0.0
    %565 = vmatprep.subr.mxu0 0.0
    %566 = vmatpush1.msra.mxu0 0.0
    %567 = vmatprep.subr.mxu0 0.0
    %568 = vmatpush1.msra.mxu0 0.0
    %569 = vmatprep.subr.mxu0 0.0
    %570 = vmatpush1.msra.mxu0 0.0
    %571 = vmatprep.subr.mxu0 0.0
    %572 = vmatpush1.msra.mxu0 0.0
    %573 = vmatprep.subr.mxu0 0.0
    %574 = vmatpush1.msra.mxu0 0.0
    %575 = vmatprep.subr.mxu0 0.0
    %576 = vmatpush1.msra.mxu0 0.0
    %577 = vmatprep.subr.mxu0 0.0
    %578 = vmatpush1.msra.mxu0 0.0
    %579 = vmatprep.subr.mxu0 0.0
    %580 = vmatpush1.msra.mxu0 0.0
    %581 = vmatprep.subr.mxu0 0.0
    %582 = vmatpush1.msra.mxu0 0.0
    %583 = vmatprep.subr.mxu0 0.0
    %584 = vmatpush1.msra.mxu0 0.0
    %585 = vmatprep.subr.mxu0 0.0
    %586 = vmatpush1.msra.mxu0 0.0
    %587 = vmatprep.subr.mxu0 0.0
    %588 = vmatpush1.msra.mxu0 0.0
    %589 = vmatprep.subr.mxu0 0.0
    %590 = vmatpush1.msra.mxu0 0.0
    %591 = vmatprep.subr.mxu0 0.0
    %592 = vmatpush1.msra.mxu0 0.0
    %593 = vmatprep.subr.mxu0 0.0
    %594 = vmatpush1.msra.mxu0 0.0
    %595 = vmatprep.subr.mxu0 0.0
    %596 = vmatpush1.msra.mxu0 0.0
    %597 = vmatprep.subr.mxu0 0.0
    %598 = vmatpush1.msra.mxu0 0.0
    %599 = vmatprep.subr.mxu0 0.0
    %600 = vmatpush1.msra.mxu0 0.0
    %601 = vmatprep.subr.mxu0 0.0
    %602 = vmatpush1.msra.mxu0 0.0
    %603 = vmatprep.subr.mxu0 0.0
    %604 = vmatpush1.msra.mxu0 0.0
    %605 = vmatprep.subr.mxu0 0.0
    %606 = vmatpush1.msra.mxu0 0.0
    %607 = vmatprep.subr.mxu0 0.0
    %608 = vmatpush1.msra.mxu0 0.0
    %609 = vmatprep.subr.mxu0 0.0
    %610 = vmatpush1.msra.mxu0 0.0
    %611 = vmatprep.mubr.f32.mxu0 0.0
    %612 = vmatmul.mubr.f32.gmra.mrb[0].mxu0 %v545
    %v613 = vpop.f32.mrb[0].mxu0
    %v614 = vadd.f32 0.0, %v613
    %v615 = vpop.f32.mrb[0].mxu0
    %616 = vdwg.mxu0
    %v618 = vrot.slane %v614, 1
    %v621 = vadd.f32 %v538, %v614
    %v622 = vadd.f32 %v539, %v618
    %v623 = vmul.f32 %v621, %v393
    %v624 = vmul.f32 %v622, %v393
    %v625 = vtanh.pop %v623
    %v626 = vtanh.pop %v624
    %v627 = vmul.f32 %v625, 0.5
    %v628 = vmul.f32 %v626, 0.5
    %v629 = vadd.f32 %v627, 0.5
    %v630 = vadd.f32 %v628, 0.5
    %v631 = vmul.f32 %v629, %v513
    %v632 = vmul.f32 %v630, %v514
    %635 = vrot.lane.b32.xlu0 %v625, 64
    %v636 = vpop.permute.xlu0 %635
    %637 = vrot.lane.b32.xlu0 %v626, 64
    %v638 = vpop.permute.xlu0 %637
    %v641 = vmul.f32 %v629, %v636
    %v642 = vmul.f32 %v630, %v638
    %645 = vrot.lane.b32.xlu0 %v641, 32
    %v646 = vpop.permute.xlu0 %645
    %647 = vrot.lane.b32.xlu0 %v642, 32
    %v648 = vpop.permute.xlu0 %647
    %v651 = vadd.f32 %v631, %v646
    %v652 = vadd.f32 %v632, %v648
    %v653 = vtanh.pop %v651
    %v654 = vtanh.pop %v652
    %657 = vrot.lane.b32.xlu0 %v653, 64
    %v658 = vpop.permute.xlu0 %657
    %659 = vrot.lane.b32.xlu0 %v654, 64
    %v660 = vpop.permute.xlu0 %659
    %v663 = vmul.f32 %v629, %v658
    %v664 = vmul.f32 %v630, %v660
    %667 = vrot.lane.b32.xlu0 %v663, 32
    %v668 = vpop.permute.xlu0 %667
    %669 = vrot.lane.b32.xlu0 %v664, 32
    %v670 = vpop.permute.xlu0 %669
    %673 = vst.msk [vmem:[#allocation5 + $0x1] sm:$0x1] %vm535, %v668
    %674 = vst.msk [vmem:[#allocation5 + $0x9] sm:$0x1] %vm535, %v670
    %v675 = vld [vmem:[#allocation4 + $0x2] sm:$0x1]
    %v676 = vld [vmem:[#allocation4 + $0xa] sm:$0x1]
    %v677 = vrot.slane %v664, 7
    %v678 = vsel %vm541, %v677, %v663
    %679 = vrot.lane.b32.xlu0 %v678, 32
    %v680 = vpop.permute.xlu0 %679
    %v681 = vsel %vm289, %v680, 0
    %683 = vmatprep.subr.mxu0 0.0
    %684 = vmatpush1.msra.mxu0 %v384
    %685 = vmatprep.subr.mxu0 0.0
    %686 = vmatpush1.msra.mxu0 %v385
    %687 = vmatprep.subr.mxu0 0.0
    %688 = vmatpush1.msra.mxu0 %v386
    %689 = vmatprep.subr.mxu0 0.0
    %690 = vmatpush1.msra.mxu0 %v387
    %691 = vmatprep.subr.mxu0 0.0
    %692 = vmatpush1.msra.mxu0 0.0
    %693 = vmatprep.subr.mxu0 0.0
    %694 = vmatpush1.msra.mxu0 0.0
    %695 = vmatprep.subr.mxu0 0.0
    %696 = vmatpush1.msra.mxu0 0.0
    %697 = vmatprep.subr.mxu0 0.0
    %698 = vmatpush1.msra.mxu0 0.0
    %699 = vmatprep.subr.mxu0 0.0
    %700 = vmatpush1.msra.mxu0 0.0
    %701 = vmatprep.subr.mxu0 0.0
    %702 = vmatpush1.msra.mxu0 0.0
    %703 = vmatprep.subr.mxu0 0.0
    %704 = vmatpush1.msra.mxu0 0.0
    %705 = vmatprep.subr.mxu0 0.0
    %706 = vmatpush1.msra.mxu0 0.0
    %707 = vmatprep.subr.mxu0 0.0
    %708 = vmatpush1.msra.mxu0 0.0
    %709 = vmatprep.subr.mxu0 0.0
    %710 = vmatpush1.msra.mxu0 0.0
    %711 = vmatprep.subr.mxu0 0.0
    %712 = vmatpush1.msra.mxu0 0.0
    %713 = vmatprep.subr.mxu0 0.0
    %714 = vmatpush1.msra.mxu0 0.0
    %715 = vmatprep.subr.mxu0 0.0
    %716 = vmatpush1.msra.mxu0 0.0
    %717 = vmatprep.subr.mxu0 0.0
    %718 = vmatpush1.msra.mxu0 0.0
    %719 = vmatprep.subr.mxu0 0.0
    %720 = vmatpush1.msra.mxu0 0.0
    %721 = vmatprep.subr.mxu0 0.0
    %722 = vmatpush1.msra.mxu0 0.0
    %723 = vmatprep.subr.mxu0 0.0
    %724 = vmatpush1.msra.mxu0 0.0
    %725 = vmatprep.subr.mxu0 0.0
    %726 = vmatpush1.msra.mxu0 0.0
    %727 = vmatprep.subr.mxu0 0.0
    %728 = vmatpush1.msra.mxu0 0.0
    %729 = vmatprep.subr.mxu0 0.0
    %730 = vmatpush1.msra.mxu0 0.0
    %731 = vmatprep.subr.mxu0 0.0
    %732 = vmatpush1.msra.mxu0 0.0
    %733 = vmatprep.subr.mxu0 0.0
    %734 = vmatpush1.msra.mxu0 0.0
    %735 = vmatprep.subr.mxu0 0.0
    %736 = vmatpush1.msra.mxu0 0.0
    %737 = vmatprep.subr.mxu0 0.0
    %738 = vmatpush1.msra.mxu0 0.0
    %739 = vmatprep.subr.mxu0 0.0
    %740 = vmatpush1.msra.mxu0 0.0
    %741 = vmatprep.subr.mxu0 0.0
    %742 = vmatpush1.msra.mxu0 0.0
    %743 = vmatprep.subr.mxu0 0.0
    %744 = vmatpush1.msra.mxu0 0.0
    %745 = vmatprep.subr.mxu0 0.0
    %746 = vmatpush1.msra.mxu0 0.0
    %747 = vmatprep.mubr.f32.mxu0 0.0
    %748 = vmatmul.mubr.f32.gmra.mrb[0].mxu0 %v681
    %v749 = vpop.f32.mrb[0].mxu0
    %v750 = vadd.f32 0.0, %v749
    %v751 = vpop.f32.mrb[0].mxu0
    %752 = vdwg.mxu0
    %v754 = vrot.slane %v750, 1
    %v757 = vadd.f32 %v675, %v750
    %v758 = vadd.f32 %v676, %v754
    %v759 = vmul.f32 %v757, %v393
    %v760 = vmul.f32 %v758, %v393
    %v761 = vtanh.pop %v759
    %v762 = vtanh.pop %v760
    %v763 = vmul.f32 %v761, 0.5
    %v764 = vmul.f32 %v762, 0.5
    %v765 = vadd.f32 %v763, 0.5
    %v766 = vadd.f32 %v764, 0.5
    %v767 = vmul.f32 %v765, %v651
    %v768 = vmul.f32 %v766, %v652
    %771 = vrot.lane.b32.xlu0 %v761, 64
    %v772 = vpop.permute.xlu0 %771
    %773 = vrot.lane.b32.xlu0 %v762, 64
    %v774 = vpop.permute.xlu0 %773
    %v777 = vmul.f32 %v765, %v772
    %v778 = vmul.f32 %v766, %v774
    %781 = vrot.lane.b32.xlu0 %v777, 32
    %v782 = vpop.permute.xlu0 %781
    %783 = vrot.lane.b32.xlu0 %v778, 32
    %v784 = vpop.permute.xlu0 %783
    %v787 = vadd.f32 %v767, %v782
    %v788 = vadd.f32 %v768, %v784
    %v789 = vtanh.pop %v787
    %v790 = vtanh.pop %v788
    %793 = vrot.lane.b32.xlu0 %v789, 64
    %v794 = vpop.permute.xlu0 %793
    %795 = vrot.lane.b32.xlu0 %v790, 64
    %v796 = vpop.permute.xlu0 %795
    %v799 = vmul.f32 %v765, %v794
    %v800 = vmul.f32 %v766, %v796
    %803 = vrot.lane.b32.xlu0 %v799, 32
    %v804 = vpop.permute.xlu0 %803
    %805 = vrot.lane.b32.xlu0 %v800, 32
    %v806 = vpop.permute.xlu0 %805
    %809 = vst.msk [vmem:[#allocation5 + $0x2] sm:$0x1] %vm535, %v804
    %810 = vst.msk [vmem:[#allocation5 + $0xa] sm:$0x1] %vm535, %v806
    %v811 = vld [vmem:[#allocation4 + $0x3] sm:$0x1]
    %v812 = vld [vmem:[#allocation4 + $0xb] sm:$0x1]
    %v813 = vrot.slane %v800, 7
    %v814 = vsel %vm541, %v813, %v799
    %815 = vrot.lane.b32.xlu0 %v814, 32
    %v816 = vpop.permute.xlu0 %815
    %v817 = vsel %vm289, %v816, 0
    %819 = vmatprep.subr.mxu0 0.0
    %820 = vmatpush1.msra.mxu0 %v384
    %821 = vmatprep.subr.mxu0 0.0
    %822 = vmatpush1.msra.mxu0 %v385
    %823 = vmatprep.subr.mxu0 0.0
    %824 = vmatpush1.msra.mxu0 %v386
    %825 = vmatprep.subr.mxu0 0.0
    %826 = vmatpush1.msra.mxu0 %v387
    %827 = vmatprep.subr.mxu0 0.0
    %828 = vmatpush1.msra.mxu0 0.0
    %829 = vmatprep.subr.mxu0 0.0
    %830 = vmatpush1.msra.mxu0 0.0
    %831 = vmatprep.subr.mxu0 0.0
    %832 = vmatpush1.msra.mxu0 0.0
    %833 = vmatprep.subr.mxu0 0.0
    %834 = vmatpush1.msra.mxu0 0.0
    %835 = vmatprep.subr.mxu0 0.0
    %836 = vmatpush1.msra.mxu0 0.0
    %837 = vmatprep.subr.mxu0 0.0
    %838 = vmatpush1.msra.mxu0 0.0
    %839 = vmatprep.subr.mxu0 0.0
    %840 = vmatpush1.msra.mxu0 0.0
    %841 = vmatprep.subr.mxu0 0.0
    %842 = vmatpush1.msra.mxu0 0.0
    %843 = vmatprep.subr.mxu0 0.0
    %844 = vmatpush1.msra.mxu0 0.0
    %845 = vmatprep.subr.mxu0 0.0
    %846 = vmatpush1.msra.mxu0 0.0
    %847 = vmatprep.subr.mxu0 0.0
    %848 = vmatpush1.msra.mxu0 0.0
    %849 = vmatprep.subr.mxu0 0.0
    %850 = vmatpush1.msra.mxu0 0.0
    %851 = vmatprep.subr.mxu0 0.0
    %852 = vmatpush1.msra.mxu0 0.0
    %853 = vmatprep.subr.mxu0 0.0
    %854 = vmatpush1.msra.mxu0 0.0
    %855 = vmatprep.subr.mxu0 0.0
    %856 = vmatpush1.msra.mxu0 0.0
    %857 = vmatprep.subr.mxu0 0.0
    %858 = vmatpush1.msra.mxu0 0.0
    %859 = vmatprep.subr.mxu0 0.0
    %860 = vmatpush1.msra.mxu0 0.0
    %861 = vmatprep.subr.mxu0 0.0
    %862 = vmatpush1.msra.mxu0 0.0
    %863 = vmatprep.subr.mxu0 0.0
    %864 = vmatpush1.msra.mxu0 0.0
    %865 = vmatprep.subr.mxu0 0.0
    %866 = vmatpush1.msra.mxu0 0.0
    %867 = vmatprep.subr.mxu0 0.0
    %868 = vmatpush1.msra.mxu0 0.0
    %869 = vmatprep.subr.mxu0 0.0
    %870 = vmatpush1.msra.mxu0 0.0
    %871 = vmatprep.subr.mxu0 0.0
    %872 = vmatpush1.msra.mxu0 0.0
    %873 = vmatprep.subr.mxu0 0.0
    %874 = vmatpush1.msra.mxu0 0.0
    %875 = vmatprep.subr.mxu0 0.0
    %876 = vmatpush1.msra.mxu0 0.0
    %877 = vmatprep.subr.mxu0 0.0
    %878 = vmatpush1.msra.mxu0 0.0
    %879 = vmatprep.subr.mxu0 0.0
    %880 = vmatpush1.msra.mxu0 0.0
    %881 = vmatprep.subr.mxu0 0.0
    %882 = vmatpush1.msra.mxu0 0.0
    %883 = vmatprep.mubr.f32.mxu0 0.0
    %884 = vmatmul.mubr.f32.gmra.mrb[0].mxu0 %v817
    %v885 = vpop.f32.mrb[0].mxu0
    %v886 = vadd.f32 0.0, %v885
    %v887 = vpop.f32.mrb[0].mxu0
    %888 = vdwg.mxu0
    %v890 = vrot.slane %v886, 1
    %v893 = vadd.f32 %v811, %v886
    %v894 = vadd.f32 %v812, %v890
    %v895 = vmul.f32 %v893, %v393
    %v896 = vmul.f32 %v894, %v393
    %v897 = vtanh.pop %v895
    %v898 = vtanh.pop %v896
    %v899 = vmul.f32 %v897, 0.5
    %v900 = vmul.f32 %v898, 0.5
    %v901 = vadd.f32 %v899, 0.5
    %v902 = vadd.f32 %v900, 0.5
    %v903 = vmul.f32 %v901, %v787
    %v904 = vmul.f32 %v902, %v788
    %907 = vrot.lane.b32.xlu0 %v897, 64
    %v908 = vpop.permute.xlu0 %907
    %909 = vrot.lane.b32.xlu0 %v898, 64
    %v910 = vpop.permute.xlu0 %909
    %v913 = vmul.f32 %v901, %v908
    %v914 = vmul.f32 %v902, %v910
    %917 = vrot.lane.b32.xlu0 %v913, 32
    %v918 = vpop.permute.xlu0 %917
    %919 = vrot.lane.b32.xlu0 %v914, 32
    %v920 = vpop.permute.xlu0 %919
    %v923 = vadd.f32 %v903, %v918
    %v924 = vadd.f32 %v904, %v920
    %v925 = vtanh.pop %v923
    %v926 = vtanh.pop %v924
    %929 = vrot.lane.b32.xlu0 %v925, 64
    %v930 = vpop.permute.xlu0 %929
    %931 = vrot.lane.b32.xlu0 %v926, 64
    %v932 = vpop.permute.xlu0 %931
    %v935 = vmul.f32 %v901, %v930
    %v936 = vmul.f32 %v902, %v932
    %939 = vrot.lane.b32.xlu0 %v935, 32
    %v940 = vpop.permute.xlu0 %939
    %941 = vrot.lane.b32.xlu0 %v936, 32
    %v942 = vpop.permute.xlu0 %941
    %945 = vst.msk [vmem:[#allocation5 + $0x3] sm:$0x1] %vm535, %v940
    %946 = vst.msk [vmem:[#allocation5 + $0xb] sm:$0x1] %vm535, %v942
    %v947 = vld [vmem:[#allocation4 + $0x4] sm:$0x1]
    %v948 = vld [vmem:[#allocation4 + $0xc] sm:$0x1]
    %v949 = vrot.slane %v936, 7
    %v950 = vsel %vm541, %v949, %v935
    %951 = vrot.lane.b32.xlu0 %v950, 32
    %v952 = vpop.permute.xlu0 %951
    %v953 = vsel %vm289, %v952, 0
    %955 = vmatprep.subr.mxu0 0.0
    %956 = vmatpush1.msra.mxu0 %v384
    %957 = vmatprep.subr.mxu0 0.0
    %958 = vmatpush1.msra.mxu0 %v385
    %959 = vmatprep.subr.mxu0 0.0
    %960 = vmatpush1.msra.mxu0 %v386
    %961 = vmatprep.subr.mxu0 0.0
    %962 = vmatpush1.msra.mxu0 %v387
    %963 = vmatprep.subr.mxu0 0.0
    %964 = vmatpush1.msra.mxu0 0.0
    %965 = vmatprep.subr.mxu0 0.0
    %966 = vmatpush1.msra.mxu0 0.0
    %967 = vmatprep.subr.mxu0 0.0
    %968 = vmatpush1.msra.mxu0 0.0
    %969 = vmatprep.subr.mxu0 0.0
    %970 = vmatpush1.msra.mxu0 0.0
    %971 = vmatprep.subr.mxu0 0.0
    %972 = vmatpush1.msra.mxu0 0.0
    %973 = vmatprep.subr.mxu0 0.0
    %974 = vmatpush1.msra.mxu0 0.0
    %975 = vmatprep.subr.mxu0 0.0
    %976 = vmatpush1.msra.mxu0 0.0
    %977 = vmatprep.subr.mxu0 0.0
    %978 = vmatpush1.msra.mxu0 0.0
    %979 = vmatprep.subr.mxu0 0.0
    %980 = vmatpush1.msra.mxu0 0.0
    %981 = vmatprep.subr.mxu0 0.0
    %982 = vmatpush1.msra.mxu0 0.0
    %983 = vmatprep.subr.mxu0 0.0
    %984 = vmatpush1.msra.mxu0 0.0
    %985 = vmatprep.subr.mxu0 0.0
    %986 = vmatpush1.msra.mxu0 0.0
    %987 = vmatprep.subr.mxu0 0.0
    %988 = vmatpush1.msra.mxu0 0.0
    %989 = vmatprep.subr.mxu0 0.0
    %990 = vmatpush1.msra.mxu0 0.0
    %991 = vmatprep.subr.mxu0 0.0
    %992 = vmatpush1.msra.mxu0 0.0
    %993 = vmatprep.subr.mxu0 0.0
    %994 = vmatpush1.msra.mxu0 0.0
    %995 = vmatprep.subr.mxu0 0.0
    %996 = vmatpush1.msra.mxu0 0.0
    %997 = vmatprep.subr.mxu0 0.0
    %998 = vmatpush1.msra.mxu0 0.0
    %999 = vmatprep.subr.mxu0 0.0
    %1000 = vmatpush1.msra.mxu0 0.0
    %1001 = vmatprep.subr.mxu0 0.0
    %1002 = vmatpush1.msra.mxu0 0.0
    %1003 = vmatprep.subr.mxu0 0.0
    %1004 = vmatpush1.msra.mxu0 0.0
    %1005 = vmatprep.subr.mxu0 0.0
    %1006 = vmatpush1.msra.mxu0 0.0
    %1007 = vmatprep.subr.mxu0 0.0
    %1008 = vmatpush1.msra.mxu0 0.0
    %1009 = vmatprep.subr.mxu0 0.0
    %1010 = vmatpush1.msra.mxu0 0.0
    %1011 = vmatprep.subr.mxu0 0.0
    %1012 = vmatpush1.msra.mxu0 0.0
    %1013 = vmatprep.subr.mxu0 0.0
    %1014 = vmatpush1.msra.mxu0 0.0
    %1015 = vmatprep.subr.mxu0 0.0
    %1016 = vmatpush1.msra.mxu0 0.0
    %1017 = vmatprep.subr.mxu0 0.0
    %1018 = vmatpush1.msra.mxu0 0.0
    %1019 = vmatprep.mubr.f32.mxu0 0.0
    %1020 = vmatmul.mubr.f32.gmra.mrb[0].mxu0 %v953
    %v1021 = vpop.f32.mrb[0].mxu0
    %v1022 = vadd.f32 0.0, %v1021
    %v1023 = vpop.f32.mrb[0].mxu0
    %1024 = vdwg.mxu0
    %v1026 = vrot.slane %v1022, 1
    %v1029 = vadd.f32 %v947, %v1022
    %v1030 = vadd.f32 %v948, %v1026
    %v1031 = vmul.f32 %v1029, %v393
    %v1032 = vmul.f32 %v1030, %v393
    %v1033 = vtanh.pop %v1031
    %v1034 = vtanh.pop %v1032
    %v1035 = vmul.f32 %v1033, 0.5
    %v1036 = vmul.f32 %v1034, 0.5
    %v1037 = vadd.f32 %v1035, 0.5
    %v1038 = vadd.f32 %v1036, 0.5
    %v1039 = vmul.f32 %v1037, %v923
    %v1040 = vmul.f32 %v1038, %v924
    %1043 = vrot.lane.b32.xlu0 %v1033, 64
    %v1044 = vpop.permute.xlu0 %1043
    %1045 = vrot.lane.b32.xlu0 %v1034, 64
    %v1046 = vpop.permute.xlu0 %1045
    %v1049 = vmul.f32 %v1037, %v1044
    %v1050 = vmul.f32 %v1038, %v1046
    %1053 = vrot.lane.b32.xlu0 %v1049, 32
    %v1054 = vpop.permute.xlu0 %1053
    %1055 = vrot.lane.b32.xlu0 %v1050, 32
    %v1056 = vpop.permute.xlu0 %1055
    %v1059 = vadd.f32 %v1039, %v1054
    %v1060 = vadd.f32 %v1040, %v1056
    %v1061 = vtanh.pop %v1059
    %v1062 = vtanh.pop %v1060
    %1065 = vrot.lane.b32.xlu0 %v1061, 64
    %v1066 = vpop.permute.xlu0 %1065
    %1067 = vrot.lane.b32.xlu0 %v1062, 64
    %v1068 = vpop.permute.xlu0 %1067
    %v1071 = vmul.f32 %v1037, %v1066
    %v1072 = vmul.f32 %v1038, %v1068
    %1075 = vrot.lane.b32.xlu0 %v1071, 32
    %v1076 = vpop.permute.xlu0 %1075
    %1077 = vrot.lane.b32.xlu0 %v1072, 32
    %v1078 = vpop.permute.xlu0 %1077
    %1081 = vst.msk [vmem:[#allocation5 + $0x4] sm:$0x1] %vm535, %v1076
    %1082 = vst.msk [vmem:[#allocation5 + $0xc] sm:$0x1] %vm535, %v1078
    %v1083 = vld [vmem:[#allocation4 + $0x5] sm:$0x1]
    %v1084 = vld [vmem:[#allocation4 + $0xd] sm:$0x1]
    %v1085 = vrot.slane %v1072, 7
    %v1086 = vsel %vm541, %v1085, %v1071
    %1087 = vrot.lane.b32.xlu0 %v1086, 32
    %v1088 = vpop.permute.xlu0 %1087
    %v1089 = vsel %vm289, %v1088, 0
    %1091 = vmatprep.subr.mxu0 0.0
    %1092 = vmatpush1.msra.mxu0 %v384
    %1093 = vmatprep.subr.mxu0 0.0
    %1094 = vmatpush1.msra.mxu0 %v385
    %1095 = vmatprep.subr.mxu0 0.0
    %1096 = vmatpush1.msra.mxu0 %v386
    %1097 = vmatprep.subr.mxu0 0.0
    %1098 = vmatpush1.msra.mxu0 %v387
    %1099 = vmatprep.subr.mxu0 0.0
    %1100 = vmatpush1.msra.mxu0 0.0
    %1101 = vmatprep.subr.mxu0 0.0
    %1102 = vmatpush1.msra.mxu0 0.0
    %1103 = vmatprep.subr.mxu0 0.0
    %1104 = vmatpush1.msra.mxu0 0.0
    %1105 = vmatprep.subr.mxu0 0.0
    %1106 = vmatpush1.msra.mxu0 0.0
    %1107 = vmatprep.subr.mxu0 0.0
    %1108 = vmatpush1.msra.mxu0 0.0
    %1109 = vmatprep.subr.mxu0 0.0
    %1110 = vmatpush1.msra.mxu0 0.0
    %1111 = vmatprep.subr.mxu0 0.0
    %1112 = vmatpush1.msra.mxu0 0.0
    %1113 = vmatprep.subr.mxu0 0.0
    %1114 = vmatpush1.msra.mxu0 0.0
    %1115 = vmatprep.subr.mxu0 0.0
    %1116 = vmatpush1.msra.mxu0 0.0
    %1117 = vmatprep.subr.mxu0 0.0
    %1118 = vmatpush1.msra.mxu0 0.0
    %1119 = vmatprep.subr.mxu0 0.0
    %1120 = vmatpush1.msra.mxu0 0.0
    %1121 = vmatprep.subr.mxu0 0.0
    %1122 = vmatpush1.msra.mxu0 0.0
    %1123 = vmatprep.subr.mxu0 0.0
    %1124 = vmatpush1.msra.mxu0 0.0
    %1125 = vmatprep.subr.mxu0 0.0
    %1126 = vmatpush1.msra.mxu0 0.0
    %1127 = vmatprep.subr.mxu0 0.0
    %1128 = vmatpush1.msra.mxu0 0.0
    %1129 = vmatprep.subr.mxu0 0.0
    %1130 = vmatpush1.msra.mxu0 0.0
    %1131 = vmatprep.subr.mxu0 0.0
    %1132 = vmatpush1.msra.mxu0 0.0
    %1133 = vmatprep.subr.mxu0 0.0
    %1134 = vmatpush1.msra.mxu0 0.0
    %1135 = vmatprep.subr.mxu0 0.0
    %1136 = vmatpush1.msra.mxu0 0.0
    %1137 = vmatprep.subr.mxu0 0.0
    %1138 = vmatpush1.msra.mxu0 0.0
    %1139 = vmatprep.subr.mxu0 0.0
    %1140 = vmatpush1.msra.mxu0 0.0
    %1141 = vmatprep.subr.mxu0 0.0
    %1142 = vmatpush1.msra.mxu0 0.0
    %1143 = vmatprep.subr.mxu0 0.0
    %1144 = vmatpush1.msra.mxu0 0.0
    %1145 = vmatprep.subr.mxu0 0.0
    %1146 = vmatpush1.msra.mxu0 0.0
    %1147 = vmatprep.subr.mxu0 0.0
    %1148 = vmatpush1.msra.mxu0 0.0
    %1149 = vmatprep.subr.mxu0 0.0
    %1150 = vmatpush1.msra.mxu0 0.0
    %1151 = vmatprep.subr.mxu0 0.0
    %1152 = vmatpush1.msra.mxu0 0.0
    %1153 = vmatprep.subr.mxu0 0.0
    %1154 = vmatpush1.msra.mxu0 0.0
    %1155 = vmatprep.mubr.f32.mxu0 0.0
    %1156 = vmatmul.mubr.f32.gmra.mrb[0].mxu0 %v1089
    %v1157 = vpop.f32.mrb[0].mxu0
    %v1158 = vadd.f32 0.0, %v1157
    %v1159 = vpop.f32.mrb[0].mxu0
    %1160 = vdwg.mxu0
    %v1162 = vrot.slane %v1158, 1
    %v1165 = vadd.f32 %v1083, %v1158
    %v1166 = vadd.f32 %v1084, %v1162
    %v1167 = vmul.f32 %v1165, %v393
    %v1168 = vmul.f32 %v1166, %v393
    %v1169 = vtanh.pop %v1167
    %v1170 = vtanh.pop %v1168
    %v1171 = vmul.f32 %v1169, 0.5
    %v1172 = vmul.f32 %v1170, 0.5
    %v1173 = vadd.f32 %v1171, 0.5
    %v1174 = vadd.f32 %v1172, 0.5
    %v1175 = vmul.f32 %v1173, %v1059
    %v1176 = vmul.f32 %v1174, %v1060
    %1179 = vrot.lane.b32.xlu0 %v1169, 64
    %v1180 = vpop.permute.xlu0 %1179
    %1181 = vrot.lane.b32.xlu0 %v1170, 64
    %v1182 = vpop.permute.xlu0 %1181
    %v1185 = vmul.f32 %v1173, %v1180
    %v1186 = vmul.f32 %v1174, %v1182
    %1189 = vrot.lane.b32.xlu0 %v1185, 32
    %v1190 = vpop.permute.xlu0 %1189
    %1191 = vrot.lane.b32.xlu0 %v1186, 32
    %v1192 = vpop.permute.xlu0 %1191
    %v1195 = vadd.f32 %v1175, %v1190
    %v1196 = vadd.f32 %v1176, %v1192
    %v1197 = vtanh.pop %v1195
    %v1198 = vtanh.pop %v1196
    %1201 = vrot.lane.b32.xlu0 %v1197, 64
    %v1202 = vpop.permute.xlu0 %1201
    %1203 = vrot.lane.b32.xlu0 %v1198, 64
    %v1204 = vpop.permute.xlu0 %1203
    %v1207 = vmul.f32 %v1173, %v1202
    %v1208 = vmul.f32 %v1174, %v1204
    %1211 = vrot.lane.b32.xlu0 %v1207, 32
    %v1212 = vpop.permute.xlu0 %1211
    %1213 = vrot.lane.b32.xlu0 %v1208, 32
    %v1214 = vpop.permute.xlu0 %1213
    %1217 = vst.msk [vmem:[#allocation5 + $0x5] sm:$0x1] %vm535, %v1212
    %1218 = vst.msk [vmem:[#allocation5 + $0xd] sm:$0x1] %vm535, %v1214
    %v1219 = vld [vmem:[#allocation4 + $0x6] sm:$0x1]
    %v1220 = vld [vmem:[#allocation4 + $0xe] sm:$0x1]
    %v1221 = vrot.slane %v1208, 7
    %v1222 = vsel %vm541, %v1221, %v1207
    %1223 = vrot.lane.b32.xlu0 %v1222, 32
    %v1224 = vpop.permute.xlu0 %1223
    %v1225 = vsel %vm289, %v1224, 0
    %1227 = vmatprep.subr.mxu0 0.0
    %1228 = vmatpush1.msra.mxu0 %v384
    %1229 = vmatprep.subr.mxu0 0.0
    %1230 = vmatpush1.msra.mxu0 %v385
    %1231 = vmatprep.subr.mxu0 0.0
    %1232 = vmatpush1.msra.mxu0 %v386
    %1233 = vmatprep.subr.mxu0 0.0
    %1234 = vmatpush1.msra.mxu0 %v387
    %1235 = vmatprep.subr.mxu0 0.0
    %1236 = vmatpush1.msra.mxu0 0.0
    %1237 = vmatprep.subr.mxu0 0.0
    %1238 = vmatpush1.msra.mxu0 0.0
    %1239 = vmatprep.subr.mxu0 0.0
    %1240 = vmatpush1.msra.mxu0 0.0
    %1241 = vmatprep.subr.mxu0 0.0
    %1242 = vmatpush1.msra.mxu0 0.0
    %1243 = vmatprep.subr.mxu0 0.0
    %1244 = vmatpush1.msra.mxu0 0.0
    %1245 = vmatprep.subr.mxu0 0.0
    %1246 = vmatpush1.msra.mxu0 0.0
    %1247 = vmatprep.subr.mxu0 0.0
    %1248 = vmatpush1.msra.mxu0 0.0
    %1249 = vmatprep.subr.mxu0 0.0
    %1250 = vmatpush1.msra.mxu0 0.0
    %1251 = vmatprep.subr.mxu0 0.0
    %1252 = vmatpush1.msra.mxu0 0.0
    %1253 = vmatprep.subr.mxu0 0.0
    %1254 = vmatpush1.msra.mxu0 0.0
    %1255 = vmatprep.subr.mxu0 0.0
    %1256 = vmatpush1.msra.mxu0 0.0
    %1257 = vmatprep.subr.mxu0 0.0
    %1258 = vmatpush1.msra.mxu0 0.0
    %1259 = vmatprep.subr.mxu0 0.0
    %1260 = vmatpush1.msra.mxu0 0.0
    %1261 = vmatprep.subr.mxu0 0.0
    %1262 = vmatpush1.msra.mxu0 0.0
    %1263 = vmatprep.subr.mxu0 0.0
    %1264 = vmatpush1.msra.mxu0 0.0
    %1265 = vmatprep.subr.mxu0 0.0
    %1266 = vmatpush1.msra.mxu0 0.0
    %1267 = vmatprep.subr.mxu0 0.0
    %1268 = vmatpush1.msra.mxu0 0.0
    %1269 = vmatprep.subr.mxu0 0.0
    %1270 = vmatpush1.msra.mxu0 0.0
    %1271 = vmatprep.subr.mxu0 0.0
    %1272 = vmatpush1.msra.mxu0 0.0
    %1273 = vmatprep.subr.mxu0 0.0
    %1274 = vmatpush1.msra.mxu0 0.0
    %1275 = vmatprep.subr.mxu0 0.0
    %1276 = vmatpush1.msra.mxu0 0.0
    %1277 = vmatprep.subr.mxu0 0.0
    %1278 = vmatpush1.msra.mxu0 0.0
    %1279 = vmatprep.subr.mxu0 0.0
    %1280 = vmatpush1.msra.mxu0 0.0
    %1281 = vmatprep.subr.mxu0 0.0
    %1282 = vmatpush1.msra.mxu0 0.0
    %1283 = vmatprep.subr.mxu0 0.0
    %1284 = vmatpush1.msra.mxu0 0.0
    %1285 = vmatprep.subr.mxu0 0.0
    %1286 = vmatpush1.msra.mxu0 0.0
    %1287 = vmatprep.subr.mxu0 0.0
    %1288 = vmatpush1.msra.mxu0 0.0
    %1289 = vmatprep.subr.mxu0 0.0
    %1290 = vmatpush1.msra.mxu0 0.0
    %1291 = vmatprep.mubr.f32.mxu0 0.0
    %1292 = vmatmul.mubr.f32.gmra.mrb[0].mxu0 %v1225
    %v1293 = vpop.f32.mrb[0].mxu0
    %v1294 = vadd.f32 0.0, %v1293
    %v1295 = vpop.f32.mrb[0].mxu0
    %1296 = vdwg.mxu0
    %v1298 = vrot.slane %v1294, 1
    %v1301 = vadd.f32 %v1219, %v1294
    %v1302 = vadd.f32 %v1220, %v1298
    %v1303 = vmul.f32 %v1301, %v393
    %v1304 = vmul.f32 %v1302, %v393
    %v1305 = vtanh.pop %v1303
    %v1306 = vtanh.pop %v1304
    %v1307 = vmul.f32 %v1305, 0.5
    %v1308 = vmul.f32 %v1306, 0.5
    %v1309 = vadd.f32 %v1307, 0.5
    %v1310 = vadd.f32 %v1308, 0.5
    %v1311 = vmul.f32 %v1309, %v1195
    %v1312 = vmul.f32 %v1310, %v1196
    %1315 = vrot.lane.b32.xlu0 %v1305, 64
    %v1316 = vpop.permute.xlu0 %1315
    %1317 = vrot.lane.b32.xlu0 %v1306, 64
    %v1318 = vpop.permute.xlu0 %1317
    %v1321 = vmul.f32 %v1309, %v1316
    %v1322 = vmul.f32 %v1310, %v1318
    %1325 = vrot.lane.b32.xlu0 %v1321, 32
    %v1326 = vpop.permute.xlu0 %1325
    %1327 = vrot.lane.b32.xlu0 %v1322, 32
    %v1328 = vpop.permute.xlu0 %1327
    %v1331 = vadd.f32 %v1311, %v1326
    %v1332 = vadd.f32 %v1312, %v1328
    %v1333 = vtanh.pop %v1331
    %v1334 = vtanh.pop %v1332
    %1337 = vrot.lane.b32.xlu0 %v1333, 64
    %v1338 = vpop.permute.xlu0 %1337
    %1339 = vrot.lane.b32.xlu0 %v1334, 64
    %v1340 = vpop.permute.xlu0 %1339
    %v1343 = vmul.f32 %v1309, %v1338
    %v1344 = vmul.f32 %v1310, %v1340
    %1347 = vrot.lane.b32.xlu0 %v1343, 32
    %v1348 = vpop.permute.xlu0 %1347
    %1349 = vrot.lane.b32.xlu0 %v1344, 32
    %v1350 = vpop.permute.xlu0 %1349
    %1353 = vst.msk [vmem:[#allocation5 + $0x6] sm:$0x1] %vm535, %v1348
    %1354 = vst.msk [vmem:[#allocation5 + $0xe] sm:$0x1] %vm535, %v1350
    %v1355 = vld [vmem:[#allocation4 + $0x7] sm:$0x1]
    %v1356 = vld [vmem:[#allocation4 + $0xf] sm:$0x1]
    %v1357 = vrot.slane %v1344, 7
    %v1358 = vsel %vm541, %v1357, %v1343
    %1359 = vrot.lane.b32.xlu0 %v1358, 32
    %v1360 = vpop.permute.xlu0 %1359
    %v1361 = vsel %vm289, %v1360, 0
    %1363 = vmatprep.subr.mxu0 0.0
    %1364 = vmatpush1.msra.mxu0 %v384
    %1365 = vmatprep.subr.mxu0 0.0
    %1366 = vmatpush1.msra.mxu0 %v385
    %1367 = vmatprep.subr.mxu0 0.0
    %1368 = vmatpush1.msra.mxu0 %v386
    %1369 = vmatprep.subr.mxu0 0.0
    %1370 = vmatpush1.msra.mxu0 %v387
    %1371 = vmatprep.subr.mxu0 0.0
    %1372 = vmatpush1.msra.mxu0 0.0
    %1373 = vmatprep.subr.mxu0 0.0
    %1374 = vmatpush1.msra.mxu0 0.0
    %1375 = vmatprep.subr.mxu0 0.0
    %1376 = vmatpush1.msra.mxu0 0.0
    %1377 = vmatprep.subr.mxu0 0.0
    %1378 = vmatpush1.msra.mxu0 0.0
    %1379 = vmatprep.subr.mxu0 0.0
    %1380 = vmatpush1.msra.mxu0 0.0
    %1381 = vmatprep.subr.mxu0 0.0
    %1382 = vmatpush1.msra.mxu0 0.0
    %1383 = vmatprep.subr.mxu0 0.0
    %1384 = vmatpush1.msra.mxu0 0.0
    %1385 = vmatprep.subr.mxu0 0.0
    %1386 = vmatpush1.msra.mxu0 0.0
    %1387 = vmatprep.subr.mxu0 0.0
    %1388 = vmatpush1.msra.mxu0 0.0
    %1389 = vmatprep.subr.mxu0 0.0
    %1390 = vmatpush1.msra.mxu0 0.0
    %1391 = vmatprep.subr.mxu0 0.0
    %1392 = vmatpush1.msra.mxu0 0.0
    %1393 = vmatprep.subr.mxu0 0.0
    %1394 = vmatpush1.msra.mxu0 0.0
    %1395 = vmatprep.subr.mxu0 0.0
    %1396 = vmatpush1.msra.mxu0 0.0
    %1397 = vmatprep.subr.mxu0 0.0
    %1398 = vmatpush1.msra.mxu0 0.0
    %1399 = vmatprep.subr.mxu0 0.0
    %1400 = vmatpush1.msra.mxu0 0.0
    %1401 = vmatprep.subr.mxu0 0.0
    %1402 = vmatpush1.msra.mxu0 0.0
    %1403 = vmatprep.subr.mxu0 0.0
    %1404 = vmatpush1.msra.mxu0 0.0
    %1405 = vmatprep.subr.mxu0 0.0
    %1406 = vmatpush1.msra.mxu0 0.0
    %1407 = vmatprep.subr.mxu0 0.0
    %1408 = vmatpush1.msra.mxu0 0.0
    %1409 = vmatprep.subr.mxu0 0.0
    %1410 = vmatpush1.msra.mxu0 0.0
    %1411 = vmatprep.subr.mxu0 0.0
    %1412 = vmatpush1.msra.mxu0 0.0
    %1413 = vmatprep.subr.mxu0 0.0
    %1414 = vmatpush1.msra.mxu0 0.0
    %1415 = vmatprep.subr.mxu0 0.0
    %1416 = vmatpush1.msra.mxu0 0.0
    %1417 = vmatprep.subr.mxu0 0.0
    %1418 = vmatpush1.msra.mxu0 0.0
    %1419 = vmatprep.subr.mxu0 0.0
    %1420 = vmatpush1.msra.mxu0 0.0
    %1421 = vmatprep.subr.mxu0 0.0
    %1422 = vmatpush1.msra.mxu0 0.0
    %1423 = vmatprep.subr.mxu0 0.0
    %1424 = vmatpush1.msra.mxu0 0.0
    %1425 = vmatprep.subr.mxu0 0.0
    %1426 = vmatpush1.msra.mxu0 0.0
    %1427 = vmatprep.mubr.f32.mxu0 0.0
    %1428 = vmatmul.mubr.f32.gmra.mrb[0].mxu0 %v1361
    %v1429 = vpop.f32.mrb[0].mxu0
    %v1430 = vadd.f32 0.0, %v1429
    %v1431 = vpop.f32.mrb[0].mxu0
    %1432 = vdwg.mxu0
    %v1434 = vrot.slane %v1430, 1
    %v1437 = vadd.f32 %v1355, %v1430
    %v1438 = vadd.f32 %v1356, %v1434
    %v1439 = vmul.f32 %v1437, %v393
    %v1440 = vmul.f32 %v1438, %v393
    %v1441 = vtanh.pop %v1439
    %v1442 = vtanh.pop %v1440
    %v1443 = vmul.f32 %v1441, 0.5
    %v1444 = vmul.f32 %v1442, 0.5
    %v1445 = vadd.f32 %v1443, 0.5
    %v1446 = vadd.f32 %v1444, 0.5
    %v1447 = vmul.f32 %v1445, %v1331
    %v1448 = vmul.f32 %v1446, %v1332
    %1451 = vrot.lane.b32.xlu0 %v1441, 64
    %v1452 = vpop.permute.xlu0 %1451
    %1453 = vrot.lane.b32.xlu0 %v1442, 64
    %v1454 = vpop.permute.xlu0 %1453
    %v1457 = vmul.f32 %v1445, %v1452
    %v1458 = vmul.f32 %v1446, %v1454
    %1461 = vrot.lane.b32.xlu0 %v1457, 32
    %v1462 = vpop.permute.xlu0 %1461
    %1463 = vrot.lane.b32.xlu0 %v1458, 32
    %v1464 = vpop.permute.xlu0 %1463
    %v1467 = vadd.f32 %v1447, %v1462
    %v1468 = vadd.f32 %v1448, %v1464
    %v1469 = vtanh.pop %v1467
    %v1470 = vtanh.pop %v1468
    %1473 = vrot.lane.b32.xlu0 %v1469, 64
    %v1474 = vpop.permute.xlu0 %1473
    %1475 = vrot.lane.b32.xlu0 %v1470, 64
    %v1476 = vpop.permute.xlu0 %1475
    %v1479 = vmul.f32 %v1445, %v1474
    %v1480 = vmul.f32 %v1446, %v1476
    %1483 = vrot.lane.b32.xlu0 %v1479, 32
    %v1484 = vpop.permute.xlu0 %1483
    %1485 = vrot.lane.b32.xlu0 %v1480, 32
    %v1486 = vpop.permute.xlu0 %1485
    %1489 = vst.msk [vmem:[#allocation5 + $0x7] sm:$0x1] %vm535, %v1484
    %1490 = vst.msk [vmem:[#allocation5 + $0xf] sm:$0x1] %vm535, %v1486
    %v1491 = vrot.slane %v1480, 7
    %v1492 = vsel %vm541, %v1491, %v1479
    %1493 = vrot.lane.b32.xlu0 %v1492, 32
    %v1494 = vpop.permute.xlu0 %1493
    %vm1496 = vcmask 254976
    %1497 = vst.msk [vmem:[#allocation2] sm:$0x3] %vm1496, %v1494
    %v1500 = vrot.slane %v1468, 7
    %v1501 = vsel %vm541, %v1500, %v1467
    %1502 = vrot.lane.b32.xlu0 %v1501, 96
    %v1503 = vpop.permute.xlu0 %1502
    %1505 = vst.msk [vmem:[#allocation3] sm:$0x3] %vm1496, %v1503
    %v1506 = vld [vmem:[#allocation5] sm:$0xff]
    %v1507 = vld [vmem:[#allocation5 + $0x8] sm:$0xff]
    %v1508 = vcombine.high %v1506, 0.0
    %v1510 = vunpack.c.l.s4 1983009808
    %v1511 = vunpack.c.0.s8 %v1510
    %v1512 = vlaneseq
    %v1513 = vshrl.u32 %v1512, 7
    %v1514 = vsub.s32 %v1511, %v1513
    %v1515 = vrot.slane %v1506, %v1514
    %v1517 = vunpack.c.l.s4 1983009808
    %v1518 = vunpack.c.0.s8 %v1517
    %v1519 = vlaneseq
    %v1520 = vshrl.u32 %v1519, 7
    %v1521 = vsub.s32 %v1518, %v1520
    %v1522 = vrot.slane %v1508, %v1521
    %v1523 = vcombine.high %v1507, 0.0
    %v1525 = vunpack.c.l.s4 1983009808
    %v1526 = vunpack.c.0.s8 %v1525
    %v1527 = vlaneseq
    %v1528 = vshrl.u32 %v1527, 7
    %v1529 = vsub.s32 %v1526, %v1528
    %v1530 = vrot.slane %v1507, %v1529
    %v1532 = vunpack.c.l.s4 1983009808
    %v1533 = vunpack.c.0.s8 %v1532
    %v1534 = vlaneseq
    %v1535 = vshrl.u32 %v1534, 7
    %v1536 = vsub.s32 %v1533, %v1535
    %v1537 = vrot.slane %v1523, %v1536
    %v1538 = vcombine.low %v1515, %v1530
    %v1539 = vcombine.high %v1515, %v1530
    %v1541 = vunpack.c.l.s4 1934713408
    %v1542 = vunpack.c.0.s8 %v1541
    %v1543 = vlaneseq
    %v1544 = vshrl.u32 %v1543, 7
    %v1545 = vsub.s32 %v1542, %v1544
    %v1546 = vrot.slane %v1538, %v1545
    %v1548 = vunpack.c.l.s4 1934713408
    %v1549 = vunpack.c.0.s8 %v1548
    %v1550 = vlaneseq
    %v1551 = vshrl.u32 %v1550, 7
    %v1552 = vsub.s32 %v1549, %v1551
    %v1553 = vrot.slane %v1539, %v1552
    %v1554 = vcombine.low %v1522, %v1537
    %v1555 = vcombine.high %v1522, %v1537
    %v1557 = vunpack.c.l.s4 1934713408
    %v1558 = vunpack.c.0.s8 %v1557
    %v1559 = vlaneseq
    %v1560 = vshrl.u32 %v1559, 7
    %v1561 = vsub.s32 %v1558, %v1560
    %v1562 = vrot.slane %v1554, %v1561
    %v1564 = vunpack.c.l.s4 1934713408
    %v1565 = vunpack.c.0.s8 %v1564
    %v1566 = vlaneseq
    %v1567 = vshrl.u32 %v1566, 7
    %v1568 = vsub.s32 %v1565, %v1567
    %v1569 = vrot.slane %v1555, %v1568
    %v1570 = vcombine.high %v1546, 0.0
    %v1571 = vcombine.high %v1553, 0.0
    %v1572 = vcombine.high %v1562, 0.0
    %v1573 = vcombine.high %v1569, 0.0
    %1575 = vrot.lane.b32.xlu0 %v1570, 32
    %v1576 = vpop.permute.xlu0 %1575
    %1579 = vrot.lane.b32.xlu0 %v1553, 64
    %v1580 = vpop.permute.xlu0 %1579
    %1583 = vrot.lane.b32.xlu0 %v1571, 96
    %v1584 = vpop.permute.xlu0 %1583
    %1587 = vrot.lane.b32.xlu0 %v1572, 32
    %v1588 = vpop.permute.xlu0 %1587
    %1591 = vrot.lane.b32.xlu0 %v1569, 64
    %v1592 = vpop.permute.xlu0 %1591
    %1595 = vrot.lane.b32.xlu0 %v1573, 96
    %v1596 = vpop.permute.xlu0 %1595
    %v1598 = vsel %vm289, %v1546, %v1576
    %vm1599 = vcmask 523264
    %v1600 = vsel %vm1599, %v1598, %v1580
    %vm1601 = vcmask 785408
    %v1602 = vsel %vm1601, %v1600, %v1584
    %v1603 = vsel %vm289, %v1562, %v1588
    %v1604 = vsel %vm1599, %v1603, %v1592
    %v1605 = vsel %vm1601, %v1604, %v1596
    %v1608 = vcombine.low %v1602, %v1605
    %v1610 = vunpack.c.l.s4 1983009808
    %v1611 = vunpack.c.0.s8 %v1610
    %v1612 = vlaneseq
    %v1613 = vshrl.u32 %v1612, 7
    %v1614 = vsub.s32 %v1611, %v1613
    %v1615 = vrot.slane %v1608, %v1614
    %1617 = vst [vmem:[#allocation14] sm:$0xf] %v1615
    // Predicated region
    $region62: #{tpu_custom_call.1} parent=1 // pred_check
      %p1618 = pneg %p95
    $region63: #{tpu_custom_call.1} parent=1 // pred_check_branch
      %1620 = sbr.rel (%p1618) target = $region65
    $region64: #{tpu_custom_call.1} parent=1 // pred_region
      %1621 = vst.msk [vmem:[#allocation15] sm:$0x3] %vm1496, %v1494
      %1622 = vst.msk [vmem:[#allocation17] sm:$0x3] %vm1496, %v1503
    $region65: #{tpu_custom_call.1} parent=1 // pred_fallthru
      _
    // Predicated region
    $region66: #{tpu_custom_call.1} parent=1 // pred_check
      _
    $region67: #{tpu_custom_call.1} parent=1 // pred_check_branch
      %1624 = sbr.rel (0) target = $region69
    $region68: #{tpu_custom_call.1} parent=1 // pred_region
      %s1626 = ssub.s32 64, 64
      %1627 = vsyncadd [#allocation8], %s1626
      %s1629 = sshll.u32 [#allocation14], 4
      %s1630 = int_to_ptr.vmem [resolvable:$true] %s1629
      %1632 = dma.vmem_to_hbm [thread:$0]  %s1630, 64, %s10, [#allocation8]
    $region69: #{tpu_custom_call.1} parent=1 // pred_fallthru
      _
    // Predicated region
    $region70: #{tpu_custom_call.1} parent=1 // pred_check
      _
    $region71: #{tpu_custom_call.1} parent=1 // pred_check_branch
      %1634 = sbr.rel (0) target = $region73
    $region72: #{tpu_custom_call.1} parent=1 // pred_region
      %s1636 = ssub.s32 32, 32
      %1637 = vsyncadd [#allocation16], %s1636
      %s1639 = sshll.u32 [#allocation15], 4
      %s1640 = int_to_ptr.vmem [resolvable:$true] %s1639
      %1642 = dma.vmem_to_hbm [thread:$0]  %s1640, 32, %s11, [#allocation16]
    $region73: #{tpu_custom_call.1} parent=1 // pred_fallthru
      _
    // Predicated region
    $region74: #{tpu_custom_call.1} parent=1 // pred_check
      _
    $region75: #{tpu_custom_call.1} parent=1 // pred_check_branch
      %1644 = sbr.rel (0) target = $region77
    $region76: #{tpu_custom_call.1} parent=1 // pred_region
      %s1646 = ssub.s32 32, 32
      %1647 = vsyncadd [#allocation16], %s1646
      %s1649 = sshll.u32 [#allocation17], 4
      %s1650 = int_to_ptr.vmem [resolvable:$true] %s1649
      %1652 = dma.vmem_to_hbm [thread:$0]  %s1650, 32, %s12, [#allocation16]
    $region77: #{tpu_custom_call.1} parent=1 // pred_fallthru
      _
    // Predicated region
    $region78: #{tpu_custom_call.1} parent=1 // pred_check
      _
    $region79: #{tpu_custom_call.1} parent=1 // pred_check_branch
      %1654 = sbr.rel (0) target = $region81
    $region80: #{tpu_custom_call.1} parent=1 // pred_region
      %1655 = dma.done [#allocation8], 64
    $region81: #{tpu_custom_call.1} parent=1 // pred_fallthru
      _
    // Predicated region
    $region82: #{tpu_custom_call.1} parent=1 // pred_check
      _
    $region83: #{tpu_custom_call.1} parent=1 // pred_check_branch
      %1657 = sbr.rel (0) target = $region85
    $region84: #{tpu_custom_call.1} parent=1 // pred_region
      %1658 = dma.done [#allocation16], 32
    $region85: #{tpu_custom_call.1} parent=1 // pred_fallthru
      _
    // Predicated region
    $region86: #{tpu_custom_call.1} parent=1 // pred_check
      _
    $region87: #{tpu_custom_call.1} parent=1 // pred_check_branch
      %1660 = sbr.rel (0) target = $region89
    $region88: #{tpu_custom_call.1} parent=1 // pred_region
      %1661 = dma.done [#allocation16], 32
    $region89: #{tpu_custom_call.1} parent=1 // pred_fallthru
      _
    %1662 = vsyncpa [#allocation7], 1
    %1663 = vsyncpa [#allocation10], 1
    %1664 = vsyncpa [#allocation13], 1
    %1665 = vsyncpa [#allocation8], 1
    %1666 = vsyncpa [#allocation16], 1

</llo_original>
